<compile_context>
chip_gen: v7x
topology: tpu7x:2x2x1
jax: 0.10.0
libtpu: 0.0.40
codegen_flags: <defaults>
</compile_context>

<pallas_src>
import jax
import jax.numpy as jnp
from jax.experimental import pallas as pl
from jax.experimental.pallas import tpu as pltpu

# ---------------- hyperparameters (small, consistent with DCN / BaseModel.__init__) -------
B = 8                     # batch size
L = 8                     # max_hist_len
EMBED_DIM = 32
ATTR_FNUM = 1
ITEM_FNUM = 1 + ATTR_FNUM                 # 2
HIST_FNUM = 2 + ATTR_FNUM                 # 3
ITM_EMB_DIM = ITEM_FNUM * EMBED_DIM       # 64
HIST_EMB_DIM = HIST_FNUM * EMBED_DIM      # 96
MODULE_INP_DIM = ITM_EMB_DIM + HIST_EMB_DIM   # 160
DEEP_ARCH = (128, 64)     # args.dcn_deep_arch
FINAL_MLP_ARCH = (128, 64)                # args.final_mlp_arch
CROSS_NUM = 3             # args.dcn_cross_num
FINAL_IN = MODULE_INP_DIM + DEEP_ARCH[-1]     # 224

ITEM_NUM, ATTR_NUM, RATING_NUM = 50, 20, 5


# ------------------------------------ Pallas kernel --------------------------------------
def dcn_kernel(
    item_ref, hist_ref, label_ref,
    wd1_i_ref, wd1_u_ref, bd1_ref, wd2_ref, bd2_ref,                  # deep_net
    wc_aa_ref, wc_ab_ref, wc_ba_ref, wc_bb_ref, bc_a_ref, bc_b_ref,   # cross_net (block-split)
    wf1_d_ref, wf1_a_ref, wf1_b_ref, bf1_ref, wf2_ref, bf2_ref,       # final_mlp
    wfc_ref, bfc_ref,                                                 # final_fc
    logits_ref, loss_ref,
):
    f32, bf16 = jnp.float32, jnp.bfloat16

    item = item_ref[...]                               # (B, 64)  f32
    # unmasked mean over history (dim=1), like the reference
    ub = jnp.sum(hist_ref[...], axis=1) * jnp.float32(1.0 / L)   # (B, 96) f32
    labels = label_ref[...]                            # (B, 1)   f32

    item_h = item.astype(bf16)
    ub_h = ub.astype(bf16)

    # ---- deep_net: first-layer weight split over the (item | user_behavior) boundary ----
    d = (jnp.dot(item_h, wd1_i_ref[...], preferred_element_type=f32)
         + jnp.dot(ub_h, wd1_u_ref[...], preferred_element_type=f32)
         + bd1_ref[...])
    d = jnp.maximum(d, 0.0)
    d = jnp.dot(d.astype(bf16), wd2_ref[...], preferred_element_type=f32) + bd2_ref[...]
    d = jnp.maximum(d, 0.0)                            # (B, 64)

    # ---- cross_net (matrix parameterization), block form: x = (a:64, b:96) -------------
    a0, b0 = item, ub
    a, b = item, ub
    for l in range(CROSS_NUM):
        a_h = a.astype(bf16)
        b_h = b.astype(bf16)
        xw_a = (jnp.dot(a_h, wc_aa_ref[l], preferred_element_type=f32)
                + jnp.dot(b_h, wc_ba_ref[l], preferred_element_type=f32)
                + bc_a_ref[l])                         # (B, 64)
        xw_b = (jnp.dot(a_h, wc_ab_ref[l], preferred_element_type=f32)
                + jnp.dot(b_h, wc_bb_ref[l], preferred_element_type=f32)
                + bc_b_ref[l])                         # (B, 96)
        a = a0 * xw_a + a
        b = b0 * xw_b + b

    # ---- final_mlp: first-layer weight split over (deep | cross_a | cross_b) -----------
    m = (jnp.dot(d.astype(bf16), wf1_d_ref[...], preferred_element_type=f32)
         + jnp.dot(a.astype(bf16), wf1_a_ref[...], preferred_element_type=f32)
         + jnp.dot(b.astype(bf16), wf1_b_ref[...], preferred_element_type=f32)
         + bf1_ref[...])
    m = jnp.maximum(m, 0.0)
    m = jnp.dot(m.astype(bf16), wf2_ref[...], preferred_element_type=f32) + bf2_ref[...]
    m = jnp.maximum(m, 0.0)                            # (B, 64)

    logits = jnp.dot(m.astype(bf16), wfc_ref[...], preferred_element_type=f32) + bfc_ref[...]
    logits_ref[...] = logits                           # (B, 1)

    # ---- get_ctr_output: BCELoss on clamped sigmoid, mean reduction (all f32) ----------
    p = 1.0 / (1.0 + jnp.exp(-logits))
    p = jnp.clip(p, 1e-7, 1.0 - 1e-7)
    bce = -(labels * jnp.log(p) + (1.0 - labels) * jnp.log(1.0 - p))
    loss_ref[...] = jnp.mean(bce, keepdims=True)       # (1, 1)


PARAM_ORDER = (
    "wd1_i", "wd1_u", "bd1", "wd2", "bd2",
    "wc_aa", "wc_ab", "wc_ba", "wc_bb", "bc_a", "bc_b",
    "wf1_d", "wf1_a", "wf1_b", "bf1", "wf2", "bf2",
    "wfc", "bfc",
)


# ------------------------------------ wrapper ---------------------------------------------
def dcn_forward(item_emb, hist_emb, labels, kparams):
    inputs = (item_emb, hist_emb, labels) + tuple(kparams[k] for k in PARAM_ORDER)
    vmem = pl.BlockSpec(memory_space=pltpu.MemorySpace.VMEM)
    logits, loss = pl.pallas_call(
        dcn_kernel,
        out_shape=(
            jax.ShapeDtypeStruct((B, 1), jnp.float32),   # logits
            jax.ShapeDtypeStruct((1, 1), jnp.float32),   # BCE loss (mean)
        ),
        in_specs=[vmem] * len(inputs),
        out_specs=(vmem, vmem),
        compiler_params=pltpu.CompilerParams(vmem_limit_bytes=16 * 1024 * 1024),
    )(*inputs)
    return {"logits": logits, "labels": labels, "loss": loss[0, 0]}


# -------------------------------- parameters (PyTorch layout, then split + bf16) ----------
def make_params(key):
    """Full weights, pre-transposed to (in_dim, out_dim) so y = x @ W + b == torch x @ W.T + b."""
    ks = iter(jax.random.split(key, 16))

    def lin(k, fan_in, fan_out):
        return 0.02 * jax.random.normal(k, (fan_in, fan_out), jnp.float32)

    p = {}
    p["wd1"] = lin(next(ks), MODULE_INP_DIM, DEEP_ARCH[0])            # (160, 128)
    p["bd1"] = jnp.zeros((1, DEEP_ARCH[0]), jnp.float32)
    p["wd2"] = lin(next(ks), DEEP_ARCH[0], DEEP_ARCH[1])              # (128, 64)
    p["bd2"] = jnp.zeros((1, DEEP_ARCH[1]), jnp.float32)
    p["wc"] = 0.02 * jax.random.normal(
        next(ks), (CROSS_NUM, MODULE_INP_DIM, MODULE_INP_DIM), jnp.float32)   # (3, 160, 160)
    p["bc"] = jnp.zeros((CROSS_NUM, 1, MODULE_INP_DIM), jnp.float32)
    p["wf1"] = lin(next(ks), FINAL_IN, FINAL_MLP_ARCH[0])             # (224, 128)
    p["bf1"] = jnp.zeros((1, FINAL_MLP_ARCH[0]), jnp.float32)
    p["wf2"] = lin(next(ks), FINAL_MLP_ARCH[0], FINAL_MLP_ARCH[1])    # (128, 64)
    p["bf2"] = jnp.zeros((1, FINAL_MLP_ARCH[1]), jnp.float32)
    p["wfc"] = lin(next(ks), FINAL_MLP_ARCH[1], 1)                    # (64, 1)
    p["bfc"] = jnp.zeros((1, 1), jnp.float32)
    return p


def prepare_params(p):
    """One-time layout plumbing: split weights at concat boundaries, cast matmul operands to bf16.

    Splitting lets the kernel replace lane-axis concatenates (at unaligned boundaries 64/160)
    with accumulated partial matmuls. Biases stay f32 (added after f32 accumulation).
    """
    bf16 = jnp.bfloat16
    D = DEEP_ARCH[-1]        # 64
    I = ITM_EMB_DIM          # 64
    q = {}
    # deep_net layer 1: rows [0:64] consume item_emb, rows [64:160] consume user_behavior
    q["wd1_i"] = p["wd1"][:I].astype(bf16)                     # (64, 128)
    q["wd1_u"] = p["wd1"][I:].astype(bf16)                     # (96, 128)
    q["bd1"] = p["bd1"]
    q["wd2"] = p["wd2"].astype(bf16)
    q["bd2"] = p["bd2"]
    # cross_net: 2x2 block split of each (160,160) layer weight
    q["wc_aa"] = p["wc"][:, :I, :I].astype(bf16)               # (3, 64, 64)
    q["wc_ab"] = p["wc"][:, :I, I:].astype(bf16)               # (3, 64, 96)
    q["wc_ba"] = p["wc"][:, I:, :I].astype(bf16)               # (3, 96, 64)
    q["wc_bb"] = p["wc"][:, I:, I:].astype(bf16)               # (3, 96, 96)
    q["bc_a"] = p["bc"][:, :, :I]                              # (3, 1, 64)
    q["bc_b"] = p["bc"][:, :, I:]                              # (3, 1, 96)
    # final_mlp layer 1: rows [0:64] deep_part, [64:128] cross item-block, [128:224] cross hist-block
    q["wf1_d"] = p["wf1"][:D].astype(bf16)                     # (64, 128)
    q["wf1_a"] = p["wf1"][D:D + I].astype(bf16)                # (64, 128)
    q["wf1_b"] = p["wf1"][D + I:].astype(bf16)                 # (96, 128)
    q["bf1"] = p["bf1"]
    q["wf2"] = p["wf2"].astype(bf16)
    q["bf2"] = p["bf2"]
    q["wfc"] = p["wfc"].astype(bf16)
    q["bfc"] = p["bfc"]
    return q


# -------------------------------- deterministic inputs ------------------------------------
def make_inputs(key):
    """process_input() equivalent: embedding-table gathers done in plain JAX (glue)."""
    ks = iter(jax.random.split(key, 16))
    item_table = 0.05 * jax.random.normal(next(ks), (ITEM_NUM + 1, EMBED_DIM), jnp.float32)
    attr_table = 0.05 * jax.random.normal(next(ks), (ATTR_NUM + 1, EMBED_DIM), jnp.float32)
    rate_table = 0.05 * jax.random.normal(next(ks), (RATING_NUM + 1, EMBED_DIM), jnp.float32)

    hist_iid = jax.random.randint(next(ks), (B, L), 0, ITEM_NUM + 1)
    hist_aid = jax.random.randint(next(ks), (B, L, ATTR_FNUM), 0, ATTR_NUM + 1)
    hist_rate = jax.random.randint(next(ks), (B, L), 0, RATING_NUM + 1)
    iid = jax.random.randint(next(ks), (B,), 0, ITEM_NUM + 1)
    aid = jax.random.randint(next(ks), (B, ATTR_FNUM), 0, ATTR_NUM + 1)

    hist_item_emb = jnp.take(item_table, hist_iid, axis=0)                          # (B, L, 32)
    hist_attr_emb = jnp.take(attr_table, hist_aid, axis=0).reshape(B, L, EMBED_DIM * ATTR_FNUM)
    hist_rate_emb = jnp.take(rate_table, hist_rate, axis=0)                         # (B, L, 32)
    hist_emb = jnp.concatenate([hist_item_emb, hist_attr_emb, hist_rate_emb], axis=-1)  # (B, L, 96)

    iid_emb = jnp.take(item_table, iid, axis=0)                                     # (B, 32)
    attr_emb = jnp.take(attr_table, aid, axis=0).reshape(B, EMBED_DIM * ATTR_FNUM)  # (B, 32)
    item_emb = jnp.concatenate([iid_emb, attr_emb], axis=-1)                        # (B, 64)

    labels = jax.random.bernoulli(next(ks), 0.5, (B, 1)).astype(jnp.float32)
    return item_emb, hist_emb, labels


if __name__ == "__main__":
    key = jax.random.PRNGKey(0)
    k_param, k_inp = jax.random.split(key)
    kparams = prepare_params(make_params(k_param))
    item_emb, hist_emb, labels = make_inputs(k_inp)

    out = dcn_forward(item_emb, hist_emb, labels, kparams)
    jax.block_until_ready(out)

    assert out["logits"].shape == (B, 1)
    assert bool(jnp.isfinite(out["logits"]).all())
    assert bool(jnp.isfinite(out["loss"]))
    print("KERNEL_OK")
</pallas_src>

<mosaic_0001>
module attributes {stable_mosaic.version = 11 : i64} {
  func.func @dcn_kernel(%arg0: memref<8x64xf32, #tpu.memory_space<vmem>>, %arg1: memref<8x8x96xf32, #tpu.memory_space<vmem>>, %arg2: memref<8x1xf32, #tpu.memory_space<vmem>>, %arg3: memref<64x128xbf16, #tpu.memory_space<vmem>>, %arg4: memref<96x128xbf16, #tpu.memory_space<vmem>>, %arg5: memref<1x128xf32, #tpu.memory_space<vmem>>, %arg6: memref<128x64xbf16, #tpu.memory_space<vmem>>, %arg7: memref<1x64xf32, #tpu.memory_space<vmem>>, %arg8: memref<3x64x64xbf16, #tpu.memory_space<vmem>>, %arg9: memref<3x64x96xbf16, #tpu.memory_space<vmem>>, %arg10: memref<3x96x64xbf16, #tpu.memory_space<vmem>>, %arg11: memref<3x96x96xbf16, #tpu.memory_space<vmem>>, %arg12: memref<3x1x64xf32, #tpu.memory_space<vmem>>, %arg13: memref<3x1x96xf32, #tpu.memory_space<vmem>>, %arg14: memref<64x128xbf16, #tpu.memory_space<vmem>>, %arg15: memref<64x128xbf16, #tpu.memory_space<vmem>>, %arg16: memref<96x128xbf16, #tpu.memory_space<vmem>>, %arg17: memref<1x128xf32, #tpu.memory_space<vmem>>, %arg18: memref<128x64xbf16, #tpu.memory_space<vmem>>, %arg19: memref<1x64xf32, #tpu.memory_space<vmem>>, %arg20: memref<64x1xbf16, #tpu.memory_space<vmem>>, %arg21: memref<1x1xf32, #tpu.memory_space<vmem>>, %arg22: memref<8x1xf32, #tpu.memory_space<vmem>>, %arg23: memref<1x1xf32, #tpu.memory_space<vmem>>) attributes {dimension_semantics = [], scalar_prefetch = 0 : i64, scratch_operands = 0 : i64, tpu.core_type = #tpu.core_type<tc>} {
    %c0 = arith.constant 0 : index
    %c0_0 = arith.constant 0 : index
    %0 = vector.load %arg0[%c0, %c0_0] : memref<8x64xf32, #tpu.memory_space<vmem>>, vector<8x64xf32>
    %c0_1 = arith.constant 0 : index
    %c0_2 = arith.constant 0 : index
    %c0_3 = arith.constant 0 : index
    %1 = vector.load %arg1[%c0_1, %c0_2, %c0_3] : memref<8x8x96xf32, #tpu.memory_space<vmem>>, vector<8x8x96xf32>
    %cst = arith.constant dense<0.000000e+00> : vector<8x96xf32>
    %2 = vector.multi_reduction <add>, %1, %cst [1] : vector<8x8x96xf32> to vector<8x96xf32>
    %cst_4 = arith.constant 1.250000e-01 : f32
    %3 = vector.broadcast %cst_4 : f32 to vector<8x96xf32>
    %4 = arith.mulf %2, %3 : vector<8x96xf32>
    %c0_5 = arith.constant 0 : index
    %c0_6 = arith.constant 0 : index
    %5 = vector.load %arg2[%c0_5, %c0_6] : memref<8x1xf32, #tpu.memory_space<vmem>>, vector<8x1xf32>
    %6 = arith.truncf %0 : vector<8x64xf32> to vector<8x64xbf16>
    %7 = arith.truncf %4 : vector<8x96xf32> to vector<8x96xbf16>
    %c0_7 = arith.constant 0 : index
    %c0_8 = arith.constant 0 : index
    %8 = vector.load %arg3[%c0_7, %c0_8] : memref<64x128xbf16, #tpu.memory_space<vmem>>, vector<64x128xbf16>
    %cst_9 = arith.constant dense<0.000000e+00> : vector<8x128xf32>
    %9 = tpu.matmul %6, %8, %cst_9 {dimension_numbers = #tpu.dot_dimension_numbers<[1], [0], [0], [1], [0, 0, 1, 1], [], []>} : vector<8x64xbf16>, vector<64x128xbf16>, vector<8x128xf32> -> vector<8x128xf32>
    %c0_10 = arith.constant 0 : index
    %c0_11 = arith.constant 0 : index
    %10 = vector.load %arg4[%c0_10, %c0_11] : memref<96x128xbf16, #tpu.memory_space<vmem>>, vector<96x128xbf16>
    %cst_12 = arith.constant dense<0.000000e+00> : vector<8x128xf32>
    %11 = tpu.matmul %7, %10, %cst_12 {dimension_numbers = #tpu.dot_dimension_numbers<[1], [0], [0], [1], [0, 0, 1, 1], [], []>} : vector<8x96xbf16>, vector<96x128xbf16>, vector<8x128xf32> -> vector<8x128xf32>
    %12 = arith.addf %9, %11 : vector<8x128xf32>
    %c0_13 = arith.constant 0 : index
    %c0_14 = arith.constant 0 : index
    %13 = vector.load %arg5[%c0_13, %c0_14] : memref<1x128xf32, #tpu.memory_space<vmem>>, vector<1x128xf32>
    %14 = vector.broadcast %13 : vector<1x128xf32> to vector<8x128xf32>
    %15 = arith.addf %12, %14 : vector<8x128xf32>
    %cst_15 = arith.constant 0.000000e+00 : f32
    %16 = vector.broadcast %cst_15 : f32 to vector<8x128xf32>
    %17 = arith.maximumf %15, %16 : vector<8x128xf32>
    %18 = arith.truncf %17 : vector<8x128xf32> to vector<8x128xbf16>
    %c0_16 = arith.constant 0 : index
    %c0_17 = arith.constant 0 : index
    %19 = vector.load %arg6[%c0_16, %c0_17] : memref<128x64xbf16, #tpu.memory_space<vmem>>, vector<128x64xbf16>
    %cst_18 = arith.constant dense<0.000000e+00> : vector<8x64xf32>
    %20 = tpu.matmul %18, %19, %cst_18 {dimension_numbers = #tpu.dot_dimension_numbers<[1], [0], [0], [1], [0, 0, 1, 1], [], []>} : vector<8x128xbf16>, vector<128x64xbf16>, vector<8x64xf32> -> vector<8x64xf32>
    %c0_19 = arith.constant 0 : index
    %c0_20 = arith.constant 0 : index
    %21 = vector.load %arg7[%c0_19, %c0_20] : memref<1x64xf32, #tpu.memory_space<vmem>>, vector<1x64xf32>
    %22 = vector.broadcast %21 : vector<1x64xf32> to vector<8x64xf32>
    %23 = arith.addf %20, %22 : vector<8x64xf32>
    %cst_21 = arith.constant 0.000000e+00 : f32
    %24 = vector.broadcast %cst_21 : f32 to vector<8x64xf32>
    %25 = arith.maximumf %23, %24 : vector<8x64xf32>
    %26 = arith.truncf %0 : vector<8x64xf32> to vector<8x64xbf16>
    %27 = arith.truncf %4 : vector<8x96xf32> to vector<8x96xbf16>
    %c0_22 = arith.constant 0 : index
    %c0_23 = arith.constant 0 : index
    %c0_24 = arith.constant 0 : index
    %28 = vector.load %arg8[%c0_22, %c0_23, %c0_24] : memref<3x64x64xbf16, #tpu.memory_space<vmem>>, vector<1x64x64xbf16>
    %29 = vector.shape_cast %28 : vector<1x64x64xbf16> to vector<64x64xbf16>
    %cst_25 = arith.constant dense<0.000000e+00> : vector<8x64xf32>
    %30 = tpu.matmul %26, %29, %cst_25 {dimension_numbers = #tpu.dot_dimension_numbers<[1], [0], [0], [1], [0, 0, 1, 1], [], []>} : vector<8x64xbf16>, vector<64x64xbf16>, vector<8x64xf32> -> vector<8x64xf32>
    %c0_26 = arith.constant 0 : index
    %c0_27 = arith.constant 0 : index
    %c0_28 = arith.constant 0 : index
    %31 = vector.load %arg10[%c0_26, %c0_27, %c0_28] : memref<3x96x64xbf16, #tpu.memory_space<vmem>>, vector<1x96x64xbf16>
    %32 = vector.shape_cast %31 : vector<1x96x64xbf16> to vector<96x64xbf16>
    %cst_29 = arith.constant dense<0.000000e+00> : vector<8x64xf32>
    %33 = tpu.matmul %27, %32, %cst_29 {dimension_numbers = #tpu.dot_dimension_numbers<[1], [0], [0], [1], [0, 0, 1, 1], [], []>} : vector<8x96xbf16>, vector<96x64xbf16>, vector<8x64xf32> -> vector<8x64xf32>
    %34 = arith.addf %30, %33 : vector<8x64xf32>
    %c0_30 = arith.constant 0 : index
    %c0_31 = arith.constant 0 : index
    %c0_32 = arith.constant 0 : index
    %35 = vector.load %arg12[%c0_30, %c0_31, %c0_32] : memref<3x1x64xf32, #tpu.memory_space<vmem>>, vector<1x1x64xf32>
    %36 = vector.shape_cast %35 : vector<1x1x64xf32> to vector<1x64xf32>
    %37 = vector.broadcast %36 : vector<1x64xf32> to vector<8x64xf32>
    %38 = arith.addf %34, %37 : vector<8x64xf32>
    %c0_33 = arith.constant 0 : index
    %c0_34 = arith.constant 0 : index
    %c0_35 = arith.constant 0 : index
    %39 = vector.load %arg9[%c0_33, %c0_34, %c0_35] : memref<3x64x96xbf16, #tpu.memory_space<vmem>>, vector<1x64x96xbf16>
    %40 = vector.shape_cast %39 : vector<1x64x96xbf16> to vector<64x96xbf16>
    %cst_36 = arith.constant dense<0.000000e+00> : vector<8x96xf32>
    %41 = tpu.matmul %26, %40, %cst_36 {dimension_numbers = #tpu.dot_dimension_numbers<[1], [0], [0], [1], [0, 0, 1, 1], [], []>} : vector<8x64xbf16>, vector<64x96xbf16>, vector<8x96xf32> -> vector<8x96xf32>
    %c0_37 = arith.constant 0 : index
    %c0_38 = arith.constant 0 : index
    %c0_39 = arith.constant 0 : index
    %42 = vector.load %arg11[%c0_37, %c0_38, %c0_39] : memref<3x96x96xbf16, #tpu.memory_space<vmem>>, vector<1x96x96xbf16>
    %43 = vector.shape_cast %42 : vector<1x96x96xbf16> to vector<96x96xbf16>
    %cst_40 = arith.constant dense<0.000000e+00> : vector<8x96xf32>
    %44 = tpu.matmul %27, %43, %cst_40 {dimension_numbers = #tpu.dot_dimension_numbers<[1], [0], [0], [1], [0, 0, 1, 1], [], []>} : vector<8x96xbf16>, vector<96x96xbf16>, vector<8x96xf32> -> vector<8x96xf32>
    %45 = arith.addf %41, %44 : vector<8x96xf32>
    %c0_41 = arith.constant 0 : index
    %c0_42 = arith.constant 0 : index
    %c0_43 = arith.constant 0 : index
    %46 = vector.load %arg13[%c0_41, %c0_42, %c0_43] : memref<3x1x96xf32, #tpu.memory_space<vmem>>, vector<1x1x96xf32>
    %47 = vector.shape_cast %46 : vector<1x1x96xf32> to vector<1x96xf32>
    %48 = vector.broadcast %47 : vector<1x96xf32> to vector<8x96xf32>
    %49 = arith.addf %45, %48 : vector<8x96xf32>
    %50 = arith.mulf %0, %38 : vector<8x64xf32>
    %51 = arith.addf %50, %0 : vector<8x64xf32>
    %52 = arith.mulf %4, %49 : vector<8x96xf32>
    %53 = arith.addf %52, %4 : vector<8x96xf32>
    %54 = arith.truncf %51 : vector<8x64xf32> to vector<8x64xbf16>
    %55 = arith.truncf %53 : vector<8x96xf32> to vector<8x96xbf16>
    %c1 = arith.constant 1 : index
    %c0_44 = arith.constant 0 : index
    %c0_45 = arith.constant 0 : index
    %56 = vector.load %arg8[%c1, %c0_44, %c0_45] : memref<3x64x64xbf16, #tpu.memory_space<vmem>>, vector<1x64x64xbf16>
    %57 = vector.shape_cast %56 : vector<1x64x64xbf16> to vector<64x64xbf16>
    %cst_46 = arith.constant dense<0.000000e+00> : vector<8x64xf32>
    %58 = tpu.matmul %54, %57, %cst_46 {dimension_numbers = #tpu.dot_dimension_numbers<[1], [0], [0], [1], [0, 0, 1, 1], [], []>} : vector<8x64xbf16>, vector<64x64xbf16>, vector<8x64xf32> -> vector<8x64xf32>
    %c1_47 = arith.constant 1 : index
    %c0_48 = arith.constant 0 : index
    %c0_49 = arith.constant 0 : index
    %59 = vector.load %arg10[%c1_47, %c0_48, %c0_49] : memref<3x96x64xbf16, #tpu.memory_space<vmem>>, vector<1x96x64xbf16>
    %60 = vector.shape_cast %59 : vector<1x96x64xbf16> to vector<96x64xbf16>
    %cst_50 = arith.constant dense<0.000000e+00> : vector<8x64xf32>
    %61 = tpu.matmul %55, %60, %cst_50 {dimension_numbers = #tpu.dot_dimension_numbers<[1], [0], [0], [1], [0, 0, 1, 1], [], []>} : vector<8x96xbf16>, vector<96x64xbf16>, vector<8x64xf32> -> vector<8x64xf32>
    %62 = arith.addf %58, %61 : vector<8x64xf32>
    %c1_51 = arith.constant 1 : index
    %c0_52 = arith.constant 0 : index
    %c0_53 = arith.constant 0 : index
    %63 = vector.load %arg12[%c1_51, %c0_52, %c0_53] : memref<3x1x64xf32, #tpu.memory_space<vmem>>, vector<1x1x64xf32>
    %64 = vector.shape_cast %63 : vector<1x1x64xf32> to vector<1x64xf32>
    %65 = vector.broadcast %64 : vector<1x64xf32> to vector<8x64xf32>
    %66 = arith.addf %62, %65 : vector<8x64xf32>
    %c1_54 = arith.constant 1 : index
    %c0_55 = arith.constant 0 : index
    %c0_56 = arith.constant 0 : index
    %67 = vector.load %arg9[%c1_54, %c0_55, %c0_56] : memref<3x64x96xbf16, #tpu.memory_space<vmem>>, vector<1x64x96xbf16>
    %68 = vector.shape_cast %67 : vector<1x64x96xbf16> to vector<64x96xbf16>
    %cst_57 = arith.constant dense<0.000000e+00> : vector<8x96xf32>
    %69 = tpu.matmul %54, %68, %cst_57 {dimension_numbers = #tpu.dot_dimension_numbers<[1], [0], [0], [1], [0, 0, 1, 1], [], []>} : vector<8x64xbf16>, vector<64x96xbf16>, vector<8x96xf32> -> vector<8x96xf32>
    %c1_58 = arith.constant 1 : index
    %c0_59 = arith.constant 0 : index
    %c0_60 = arith.constant 0 : index
    %70 = vector.load %arg11[%c1_58, %c0_59, %c0_60] : memref<3x96x96xbf16, #tpu.memory_space<vmem>>, vector<1x96x96xbf16>
    %71 = vector.shape_cast %70 : vector<1x96x96xbf16> to vector<96x96xbf16>
    %cst_61 = arith.constant dense<0.000000e+00> : vector<8x96xf32>
    %72 = tpu.matmul %55, %71, %cst_61 {dimension_numbers = #tpu.dot_dimension_numbers<[1], [0], [0], [1], [0, 0, 1, 1], [], []>} : vector<8x96xbf16>, vector<96x96xbf16>, vector<8x96xf32> -> vector<8x96xf32>
    %73 = arith.addf %69, %72 : vector<8x96xf32>
    %c1_62 = arith.constant 1 : index
    %c0_63 = arith.constant 0 : index
    %c0_64 = arith.constant 0 : index
    %74 = vector.load %arg13[%c1_62, %c0_63, %c0_64] : memref<3x1x96xf32, #tpu.memory_space<vmem>>, vector<1x1x96xf32>
    %75 = vector.shape_cast %74 : vector<1x1x96xf32> to vector<1x96xf32>
    %76 = vector.broadcast %75 : vector<1x96xf32> to vector<8x96xf32>
    %77 = arith.addf %73, %76 : vector<8x96xf32>
    %78 = arith.mulf %0, %66 : vector<8x64xf32>
    %79 = arith.addf %78, %51 : vector<8x64xf32>
    %80 = arith.mulf %4, %77 : vector<8x96xf32>
    %81 = arith.addf %80, %53 : vector<8x96xf32>
    %82 = arith.truncf %79 : vector<8x64xf32> to vector<8x64xbf16>
    %83 = arith.truncf %81 : vector<8x96xf32> to vector<8x96xbf16>
    %c2 = arith.constant 2 : index
    %c0_65 = arith.constant 0 : index
    %c0_66 = arith.constant 0 : index
    %84 = vector.load %arg8[%c2, %c0_65, %c0_66] : memref<3x64x64xbf16, #tpu.memory_space<vmem>>, vector<1x64x64xbf16>
    %85 = vector.shape_cast %84 : vector<1x64x64xbf16> to vector<64x64xbf16>
    %cst_67 = arith.constant dense<0.000000e+00> : vector<8x64xf32>
    %86 = tpu.matmul %82, %85, %cst_67 {dimension_numbers = #tpu.dot_dimension_numbers<[1], [0], [0], [1], [0, 0, 1, 1], [], []>} : vector<8x64xbf16>, vector<64x64xbf16>, vector<8x64xf32> -> vector<8x64xf32>
    %c2_68 = arith.constant 2 : index
    %c0_69 = arith.constant 0 : index
    %c0_70 = arith.constant 0 : index
    %87 = vector.load %arg10[%c2_68, %c0_69, %c0_70] : memref<3x96x64xbf16, #tpu.memory_space<vmem>>, vector<1x96x64xbf16>
    %88 = vector.shape_cast %87 : vector<1x96x64xbf16> to vector<96x64xbf16>
    %cst_71 = arith.constant dense<0.000000e+00> : vector<8x64xf32>
    %89 = tpu.matmul %83, %88, %cst_71 {dimension_numbers = #tpu.dot_dimension_numbers<[1], [0], [0], [1], [0, 0, 1, 1], [], []>} : vector<8x96xbf16>, vector<96x64xbf16>, vector<8x64xf32> -> vector<8x64xf32>
    %90 = arith.addf %86, %89 : vector<8x64xf32>
    %c2_72 = arith.constant 2 : index
    %c0_73 = arith.constant 0 : index
    %c0_74 = arith.constant 0 : index
    %91 = vector.load %arg12[%c2_72, %c0_73, %c0_74] : memref<3x1x64xf32, #tpu.memory_space<vmem>>, vector<1x1x64xf32>
    %92 = vector.shape_cast %91 : vector<1x1x64xf32> to vector<1x64xf32>
    %93 = vector.broadcast %92 : vector<1x64xf32> to vector<8x64xf32>
    %94 = arith.addf %90, %93 : vector<8x64xf32>
    %c2_75 = arith.constant 2 : index
    %c0_76 = arith.constant 0 : index
    %c0_77 = arith.constant 0 : index
    %95 = vector.load %arg9[%c2_75, %c0_76, %c0_77] : memref<3x64x96xbf16, #tpu.memory_space<vmem>>, vector<1x64x96xbf16>
    %96 = vector.shape_cast %95 : vector<1x64x96xbf16> to vector<64x96xbf16>
    %cst_78 = arith.constant dense<0.000000e+00> : vector<8x96xf32>
    %97 = tpu.matmul %82, %96, %cst_78 {dimension_numbers = #tpu.dot_dimension_numbers<[1], [0], [0], [1], [0, 0, 1, 1], [], []>} : vector<8x64xbf16>, vector<64x96xbf16>, vector<8x96xf32> -> vector<8x96xf32>
    %c2_79 = arith.constant 2 : index
    %c0_80 = arith.constant 0 : index
    %c0_81 = arith.constant 0 : index
    %98 = vector.load %arg11[%c2_79, %c0_80, %c0_81] : memref<3x96x96xbf16, #tpu.memory_space<vmem>>, vector<1x96x96xbf16>
    %99 = vector.shape_cast %98 : vector<1x96x96xbf16> to vector<96x96xbf16>
    %cst_82 = arith.constant dense<0.000000e+00> : vector<8x96xf32>
    %100 = tpu.matmul %83, %99, %cst_82 {dimension_numbers = #tpu.dot_dimension_numbers<[1], [0], [0], [1], [0, 0, 1, 1], [], []>} : vector<8x96xbf16>, vector<96x96xbf16>, vector<8x96xf32> -> vector<8x96xf32>
    %101 = arith.addf %97, %100 : vector<8x96xf32>
    %c2_83 = arith.constant 2 : index
    %c0_84 = arith.constant 0 : index
    %c0_85 = arith.constant 0 : index
    %102 = vector.load %arg13[%c2_83, %c0_84, %c0_85] : memref<3x1x96xf32, #tpu.memory_space<vmem>>, vector<1x1x96xf32>
    %103 = vector.shape_cast %102 : vector<1x1x96xf32> to vector<1x96xf32>
    %104 = vector.broadcast %103 : vector<1x96xf32> to vector<8x96xf32>
    %105 = arith.addf %101, %104 : vector<8x96xf32>
    %106 = arith.mulf %0, %94 : vector<8x64xf32>
    %107 = arith.addf %106, %79 : vector<8x64xf32>
    %108 = arith.mulf %4, %105 : vector<8x96xf32>
    %109 = arith.addf %108, %81 : vector<8x96xf32>
    %110 = arith.truncf %25 : vector<8x64xf32> to vector<8x64xbf16>
    %c0_86 = arith.constant 0 : index
    %c0_87 = arith.constant 0 : index
    %111 = vector.load %arg14[%c0_86, %c0_87] : memref<64x128xbf16, #tpu.memory_space<vmem>>, vector<64x128xbf16>
    %cst_88 = arith.constant dense<0.000000e+00> : vector<8x128xf32>
    %112 = tpu.matmul %110, %111, %cst_88 {dimension_numbers = #tpu.dot_dimension_numbers<[1], [0], [0], [1], [0, 0, 1, 1], [], []>} : vector<8x64xbf16>, vector<64x128xbf16>, vector<8x128xf32> -> vector<8x128xf32>
    %113 = arith.truncf %107 : vector<8x64xf32> to vector<8x64xbf16>
    %c0_89 = arith.constant 0 : index
    %c0_90 = arith.constant 0 : index
    %114 = vector.load %arg15[%c0_89, %c0_90] : memref<64x128xbf16, #tpu.memory_space<vmem>>, vector<64x128xbf16>
    %cst_91 = arith.constant dense<0.000000e+00> : vector<8x128xf32>
    %115 = tpu.matmul %113, %114, %cst_91 {dimension_numbers = #tpu.dot_dimension_numbers<[1], [0], [0], [1], [0, 0, 1, 1], [], []>} : vector<8x64xbf16>, vector<64x128xbf16>, vector<8x128xf32> -> vector<8x128xf32>
    %116 = arith.addf %112, %115 : vector<8x128xf32>
    %117 = arith.truncf %109 : vector<8x96xf32> to vector<8x96xbf16>
    %c0_92 = arith.constant 0 : index
    %c0_93 = arith.constant 0 : index
    %118 = vector.load %arg16[%c0_92, %c0_93] : memref<96x128xbf16, #tpu.memory_space<vmem>>, vector<96x128xbf16>
    %cst_94 = arith.constant dense<0.000000e+00> : vector<8x128xf32>
    %119 = tpu.matmul %117, %118, %cst_94 {dimension_numbers = #tpu.dot_dimension_numbers<[1], [0], [0], [1], [0, 0, 1, 1], [], []>} : vector<8x96xbf16>, vector<96x128xbf16>, vector<8x128xf32> -> vector<8x128xf32>
    %120 = arith.addf %116, %119 : vector<8x128xf32>
    %c0_95 = arith.constant 0 : index
    %c0_96 = arith.constant 0 : index
    %121 = vector.load %arg17[%c0_95, %c0_96] : memref<1x128xf32, #tpu.memory_space<vmem>>, vector<1x128xf32>
    %122 = vector.broadcast %121 : vector<1x128xf32> to vector<8x128xf32>
    %123 = arith.addf %120, %122 : vector<8x128xf32>
    %cst_97 = arith.constant 0.000000e+00 : f32
    %124 = vector.broadcast %cst_97 : f32 to vector<8x128xf32>
    %125 = arith.maximumf %123, %124 : vector<8x128xf32>
    %126 = arith.truncf %125 : vector<8x128xf32> to vector<8x128xbf16>
    %c0_98 = arith.constant 0 : index
    %c0_99 = arith.constant 0 : index
    %127 = vector.load %arg18[%c0_98, %c0_99] : memref<128x64xbf16, #tpu.memory_space<vmem>>, vector<128x64xbf16>
    %cst_100 = arith.constant dense<0.000000e+00> : vector<8x64xf32>
    %128 = tpu.matmul %126, %127, %cst_100 {dimension_numbers = #tpu.dot_dimension_numbers<[1], [0], [0], [1], [0, 0, 1, 1], [], []>} : vector<8x128xbf16>, vector<128x64xbf16>, vector<8x64xf32> -> vector<8x64xf32>
    %c0_101 = arith.constant 0 : index
    %c0_102 = arith.constant 0 : index
    %129 = vector.load %arg19[%c0_101, %c0_102] : memref<1x64xf32, #tpu.memory_space<vmem>>, vector<1x64xf32>
    %130 = vector.broadcast %129 : vector<1x64xf32> to vector<8x64xf32>
    %131 = arith.addf %128, %130 : vector<8x64xf32>
    %cst_103 = arith.constant 0.000000e+00 : f32
    %132 = vector.broadcast %cst_103 : f32 to vector<8x64xf32>
    %133 = arith.maximumf %131, %132 : vector<8x64xf32>
    %134 = arith.truncf %133 : vector<8x64xf32> to vector<8x64xbf16>
    %c0_104 = arith.constant 0 : index
    %c0_105 = arith.constant 0 : index
    %135 = vector.load %arg20[%c0_104, %c0_105] : memref<64x1xbf16, #tpu.memory_space<vmem>>, vector<64x1xbf16>
    %cst_106 = arith.constant dense<0.000000e+00> : vector<8x1xf32>
    %136 = tpu.matmul %134, %135, %cst_106 {dimension_numbers = #tpu.dot_dimension_numbers<[1], [0], [0], [1], [0, 0, 1, 1], [], []>} : vector<8x64xbf16>, vector<64x1xbf16>, vector<8x1xf32> -> vector<8x1xf32>
    %c0_107 = arith.constant 0 : index
    %c0_108 = arith.constant 0 : index
    %137 = vector.load %arg21[%c0_107, %c0_108] : memref<1x1xf32, #tpu.memory_space<vmem>>, vector<1x1xf32>
    %138 = vector.broadcast %137 : vector<1x1xf32> to vector<8x1xf32>
    %139 = arith.addf %136, %138 : vector<8x1xf32>
    %c0_109 = arith.constant 0 : index
    %c0_110 = arith.constant 0 : index
    %140 = vector.load %arg22[%c0_109, %c0_110] : memref<8x1xf32, #tpu.memory_space<vmem>>, vector<8x1xf32>
    tpu.vector_store %arg22[%c0_109, %c0_110], %139 {strides = array<i32>} : memref<8x1xf32, #tpu.memory_space<vmem>>, vector<8x1xf32>,
    %cst_111 = arith.constant 0.000000e+00 : f32
    %141 = vector.broadcast %cst_111 : f32 to vector<8x1xf32>
    %142 = arith.subf %141, %139 : vector<8x1xf32>
    %143 = math.exp %142 : vector<8x1xf32>
    %cst_112 = arith.constant 1.000000e+00 : f32
    %144 = vector.broadcast %cst_112 : f32 to vector<8x1xf32>
    %145 = arith.addf %144, %143 : vector<8x1xf32>
    %cst_113 = arith.constant 1.000000e+00 : f32
    %146 = vector.broadcast %cst_113 : f32 to vector<8x1xf32>
    %147 = arith.divf %146, %145 : vector<8x1xf32>
    %cst_114 = arith.constant 1.000000e-07 : f32
    %cst_115 = arith.constant 0.99999988 : f32
    %148 = vector.broadcast %cst_114 : f32 to vector<8x1xf32>
    %149 = arith.maximumf %148, %147 : vector<8x1xf32>
    %150 = vector.broadcast %cst_115 : f32 to vector<8x1xf32>
    %151 = arith.minimumf %150, %149 : vector<8x1xf32>
    %152 = math.log %151 : vector<8x1xf32>
    %153 = arith.mulf %5, %152 : vector<8x1xf32>
    %cst_116 = arith.constant 1.000000e+00 : f32
    %154 = vector.broadcast %cst_116 : f32 to vector<8x1xf32>
    %155 = arith.subf %154, %5 : vector<8x1xf32>
    %cst_117 = arith.constant 1.000000e+00 : f32
    %156 = vector.broadcast %cst_117 : f32 to vector<8x1xf32>
    %157 = arith.subf %156, %151 : vector<8x1xf32>
    %158 = math.log %157 : vector<8x1xf32>
    %159 = arith.mulf %155, %158 : vector<8x1xf32>
    %160 = arith.addf %153, %159 : vector<8x1xf32>
    %cst_118 = arith.constant 0.000000e+00 : f32
    %161 = vector.broadcast %cst_118 : f32 to vector<8x1xf32>
    %162 = arith.subf %161, %160 : vector<8x1xf32>
    %163 = vector.shape_cast %162 : vector<8x1xf32> to vector<1x8x1xf32>
    %cst_119 = arith.constant dense<0.000000e+00> : vector<1xf32>
    %164 = vector.multi_reduction <add>, %163, %cst_119 [1, 2] : vector<1x8x1xf32> to vector<1xf32>
    %165 = vector.shape_cast %164 : vector<1xf32> to vector<1x1x1xf32>
    %166 = vector.extract %165[0, 0, 0] : f32 from vector<1x1x1xf32>
    %167 = vector.broadcast %166 : f32 to vector<1x1xf32>
    %cst_120 = arith.constant 8.000000e+00 : f32
    %168 = vector.broadcast %cst_120 : f32 to vector<1x1xf32>
    %169 = arith.divf %167, %168 : vector<1x1xf32>
    %c0_121 = arith.constant 0 : index
    %c0_122 = arith.constant 0 : index
    %170 = vector.load %arg23[%c0_121, %c0_122] : memref<1x1xf32, #tpu.memory_space<vmem>>, vector<1x1xf32>
    tpu.vector_store %arg23[%c0_121, %c0_122], %169 {strides = array<i32>} : memref<1x1xf32, #tpu.memory_space<vmem>>, vector<1x1xf32>,
    return
  }
}

</mosaic_0001>

<llo_original>
// kernel: tpu_custom_call.1
$region0: #{tpu_custom_call.1}
  #allocation0 [shape = 'u32[]', space=smem, size = 0x4, offset = 0x4, fixed_abs, tag = 'smem constant byte address 0x4 - core index']
  #allocation1 [shape = 'u32[144,128]{1,0:T(1,128)}', space=vmem, size = 0x12000, scoped, tag = 'internal scratch']
  #allocation2 [shape = 'f32[1,1]{1,0:T(1,128)S(1)}', space=vmem, size = 0x200, scoped, tag = 'scoped memory for tpu_custom_call.1']
  %s0 = inlined_call_operand.hbm [shape: f32[8,64], index: 0, kind: input, shape index: {}]
  %s1 = inlined_call_operand.hbm [shape: f32[8,8,96], index: 1, kind: input, shape index: {}]
  %s2 = inlined_call_operand.vmem [shape: f32[8,1], index: 2, kind: input, shape index: {}]
  %s3 = inlined_call_operand.hbm [shape: bf16[64,128], index: 3, kind: input, shape index: {}]
  %s4 = inlined_call_operand.vmem [shape: bf16[96,128], index: 4, kind: input, shape index: {}]
  %s5 = inlined_call_operand.hbm [shape: f32[1,128], index: 5, kind: input, shape index: {}]
  %s6 = inlined_call_operand.vmem [shape: bf16[128,64], index: 6, kind: input, shape index: {}]
  %s7 = inlined_call_operand.hbm [shape: f32[1,64], index: 7, kind: input, shape index: {}]
  %s8 = inlined_call_operand.vmem [shape: bf16[3,64,64], index: 8, kind: input, shape index: {}]
  %s9 = inlined_call_operand.vmem [shape: bf16[3,64,96], index: 9, kind: input, shape index: {}]
  %s10 = inlined_call_operand.vmem [shape: bf16[3,96,64], index: 10, kind: input, shape index: {}]
  %s11 = inlined_call_operand.vmem [shape: bf16[3,96,96], index: 11, kind: input, shape index: {}]
  %s12 = inlined_call_operand.vmem [shape: f32[3,1,64], index: 12, kind: input, shape index: {}]
  %s13 = inlined_call_operand.vmem [shape: f32[3,1,96], index: 13, kind: input, shape index: {}]
  %s14 = inlined_call_operand.hbm [shape: bf16[64,128], index: 14, kind: input, shape index: {}]
  %s15 = inlined_call_operand.hbm [shape: bf16[64,128], index: 15, kind: input, shape index: {}]
  %s16 = inlined_call_operand.vmem [shape: bf16[96,128], index: 16, kind: input, shape index: {}]
  %s17 = inlined_call_operand.vmem [shape: f32[1,128], index: 17, kind: input, shape index: {}]
  %s18 = inlined_call_operand.vmem [shape: bf16[128,64], index: 18, kind: input, shape index: {}]
  %s19 = inlined_call_operand.vmem [shape: f32[1,64], index: 19, kind: input, shape index: {}]
  %s20 = inlined_call_operand.vmem [shape: bf16[64,1], index: 20, kind: input, shape index: {}]
  %s21 = inlined_call_operand.<no memory space> [shape: f32[1,1], index: 21, kind: input, shape index: {}]
  %s22 = inlined_call_operand.vmem [shape: f32[8,1], index: 22, kind: output, shape index: {0}]
  %s23 = inlined_call_operand.hbm [shape: f32[1,1], index: 23, kind: output, shape index: {1}]
  %24 = xla_tuple %s22, %s23
  %s25 = sld [smem:[#allocation0]]
  $region134: #{tpu_custom_call.1} parent=0
    _
  %s27 = ssub.s32 1, %s25
  %s28 = scalar_select 0, %s27, %s25
  %v29 = vstv %s21
  %30 = vst [vmem:[#allocation2] sm:$0x1] %v29
  $region1: #{tpu_custom_call.1} parent=0
    #allocation3 [shape = 'u8[4096]{0}', space=vmem, size = 0x1000, scoped, tag = 'input window, operand 0, single buffered']
    #allocation4 [shape = 's32[1]{0}', space=sflag, size = 0x4, scoped, tag = 'scoped memory for tpu_custom_call.1']
    #allocation5 [shape = 's32[1]{0}', space=sflag, size = 0x4, scoped, tag = 'scoped memory for tpu_custom_call.1']
    #allocation6 [shape = 'u8[32768]{0}', space=vmem, size = 0x8000, scoped, tag = 'input window, operand 1, single buffered']
    #allocation7 [shape = 's32[1]{0}', space=sflag, size = 0x4, scoped, tag = 'scoped memory for tpu_custom_call.1']
    #allocation8 [shape = 'u8[16384]{0}', space=vmem, size = 0x4000, scoped, tag = 'input window, operand 3, single buffered']
    #allocation9 [shape = 'u8[512]{0}', space=vmem, size = 0x400, scoped, tag = 'input window, operand 5, single buffered']
    #allocation10 [shape = 's32[1]{0}', space=sflag, size = 0x4, scoped, tag = 'scoped memory for tpu_custom_call.1']
    #allocation11 [shape = 'u8[512]{0}', space=vmem, size = 0x400, scoped, tag = 'input window, operand 7, single buffered']
    #allocation12 [shape = 'u8[16384]{0}', space=vmem, size = 0x4000, scoped, tag = 'input window, operand 14, single buffered']
    #allocation13 [shape = 's32[1]{0}', space=sflag, size = 0x4, scoped, tag = 'scoped memory for tpu_custom_call.1']
    #allocation14 [shape = 'u8[16384]{0}', space=vmem, size = 0x4000, scoped, tag = 'input window, operand 15, single buffered']
    #allocation15 [shape = 'u8[512]{0}', space=vmem, size = 0x400, scoped, tag = 'output window, operand 1, single buffered']
    %31 = vsyncpa [#allocation4], 0
    %32 = vsyncpa [#allocation7], 0
    %33 = vsyncpa [#allocation10], 0
    %34 = vsyncpa [#allocation13], 0
    %35 = vsyncpa [#allocation5], 0
    // Predicated region
    $region2: #{tpu_custom_call.1} parent=1 // pred_check
      _
    $region3: #{tpu_custom_call.1} parent=1 // pred_check_branch
      %37 = sbr.rel (0) target = $region5
    $region4: #{tpu_custom_call.1} parent=1 // pred_region
      %s39 = ssub.s32 128, 128
      %40 = vsyncadd [#allocation4], %s39
      %s42 = sshll.u32 [#allocation3], 4
      %s43 = int_to_ptr.vmem [resolvable:$true] %s42
      %45 = dma.hbm_to_vmem [thread:$0]  %s0, 128, %s43, [#allocation4]
    $region5: #{tpu_custom_call.1} parent=1 // pred_fallthru
      _
    // Predicated region
    $region6: #{tpu_custom_call.1} parent=1 // pred_check
      _
    $region7: #{tpu_custom_call.1} parent=1 // pred_check_branch
      %47 = sbr.rel (0) target = $region9
    $region8: #{tpu_custom_call.1} parent=1 // pred_region
      %s49 = ssub.s32 1024, 1024
      %50 = vsyncadd [#allocation7], %s49
      %s51 = sshll.u32 [#allocation6], 4
      %s52 = int_to_ptr.vmem [resolvable:$true] %s51
      %57 = dma.hbm_to_vmem [thread:$0]  %s1, 1024, %s52, [#allocation7], 128, 128, 8
    $region9: #{tpu_custom_call.1} parent=1 // pred_fallthru
      _
    // Predicated region
    $region10: #{tpu_custom_call.1} parent=1 // pred_check
      _
    $region11: #{tpu_custom_call.1} parent=1 // pred_check_branch
      %59 = sbr.rel (0) target = $region13
    $region12: #{tpu_custom_call.1} parent=1 // pred_region
      _
    $region13: #{tpu_custom_call.1} parent=1 // pred_fallthru
      _
    // Predicated region
    $region14: #{tpu_custom_call.1} parent=1 // pred_check
      _
    $region15: #{tpu_custom_call.1} parent=1 // pred_check_branch
      %61 = sbr.rel (0) target = $region17
    $region16: #{tpu_custom_call.1} parent=1 // pred_region
      %s63 = ssub.s32 512, 512
      %64 = vsyncadd [#allocation7], %s63
      %s65 = sshll.u32 [#allocation8], 4
      %s66 = int_to_ptr.vmem [resolvable:$true] %s65
      %71 = dma.hbm_to_vmem [thread:$0]  %s3, 512, %s66, [#allocation7], 64, 64, 4
    $region17: #{tpu_custom_call.1} parent=1 // pred_fallthru
      _
    // Predicated region
    $region18: #{tpu_custom_call.1} parent=1 // pred_check
      _
    $region19: #{tpu_custom_call.1} parent=1 // pred_check_branch
      %73 = sbr.rel (0) target = $region21
    $region20: #{tpu_custom_call.1} parent=1 // pred_region
      _
    $region21: #{tpu_custom_call.1} parent=1 // pred_fallthru
      _
    // Predicated region
    $region22: #{tpu_custom_call.1} parent=1 // pred_check
      _
    $region23: #{tpu_custom_call.1} parent=1 // pred_check_branch
      %75 = sbr.rel (0) target = $region25
    $region24: #{tpu_custom_call.1} parent=1 // pred_region
      %s77 = ssub.s32 16, 16
      %78 = vsyncadd [#allocation10], %s77
      %s80 = sshll.u32 [#allocation9], 4
      %s81 = int_to_ptr.vmem [resolvable:$true] %s80
      %83 = dma.hbm_to_vmem [thread:$0]  %s5, 16, %s81, [#allocation10]
    $region25: #{tpu_custom_call.1} parent=1 // pred_fallthru
      _
    // Predicated region
    $region26: #{tpu_custom_call.1} parent=1 // pred_check
      _
    $region27: #{tpu_custom_call.1} parent=1 // pred_check_branch
      %85 = sbr.rel (0) target = $region29
    $region28: #{tpu_custom_call.1} parent=1 // pred_region
      _
    $region29: #{tpu_custom_call.1} parent=1 // pred_fallthru
      _
    // Predicated region
    $region30: #{tpu_custom_call.1} parent=1 // pred_check
      _
    $region31: #{tpu_custom_call.1} parent=1 // pred_check_branch
      %87 = sbr.rel (0) target = $region33
    $region32: #{tpu_custom_call.1} parent=1 // pred_region
      %s89 = ssub.s32 16, 16
      %90 = vsyncadd [#allocation10], %s89
      %s92 = sshll.u32 [#allocation11], 4
      %s93 = int_to_ptr.vmem [resolvable:$true] %s92
      %95 = dma.hbm_to_vmem [thread:$0]  %s7, 16, %s93, [#allocation10]
    $region33: #{tpu_custom_call.1} parent=1 // pred_fallthru
      _
    // Predicated region
    $region34: #{tpu_custom_call.1} parent=1 // pred_check
      _
    $region35: #{tpu_custom_call.1} parent=1 // pred_check_branch
      %97 = sbr.rel (0) target = $region37
    $region36: #{tpu_custom_call.1} parent=1 // pred_region
      _
    $region37: #{tpu_custom_call.1} parent=1 // pred_fallthru
      _
    // Predicated region
    $region38: #{tpu_custom_call.1} parent=1 // pred_check
      _
    $region39: #{tpu_custom_call.1} parent=1 // pred_check_branch
      %99 = sbr.rel (0) target = $region41
    $region40: #{tpu_custom_call.1} parent=1 // pred_region
      _
    $region41: #{tpu_custom_call.1} parent=1 // pred_fallthru
      _
    // Predicated region
    $region42: #{tpu_custom_call.1} parent=1 // pred_check
      _
    $region43: #{tpu_custom_call.1} parent=1 // pred_check_branch
      %101 = sbr.rel (0) target = $region45
    $region44: #{tpu_custom_call.1} parent=1 // pred_region
      _
    $region45: #{tpu_custom_call.1} parent=1 // pred_fallthru
      _
    // Predicated region
    $region46: #{tpu_custom_call.1} parent=1 // pred_check
      _
    $region47: #{tpu_custom_call.1} parent=1 // pred_check_branch
      %103 = sbr.rel (0) target = $region49
    $region48: #{tpu_custom_call.1} parent=1 // pred_region
      _
    $region49: #{tpu_custom_call.1} parent=1 // pred_fallthru
      _
    // Predicated region
    $region50: #{tpu_custom_call.1} parent=1 // pred_check
      _
    $region51: #{tpu_custom_call.1} parent=1 // pred_check_branch
      %105 = sbr.rel (0) target = $region53
    $region52: #{tpu_custom_call.1} parent=1 // pred_region
      _
    $region53: #{tpu_custom_call.1} parent=1 // pred_fallthru
      _
    // Predicated region
    $region54: #{tpu_custom_call.1} parent=1 // pred_check
      _
    $region55: #{tpu_custom_call.1} parent=1 // pred_check_branch
      %107 = sbr.rel (0) target = $region57
    $region56: #{tpu_custom_call.1} parent=1 // pred_region
      _
    $region57: #{tpu_custom_call.1} parent=1 // pred_fallthru
      _
    // Predicated region
    $region58: #{tpu_custom_call.1} parent=1 // pred_check
      _
    $region59: #{tpu_custom_call.1} parent=1 // pred_check_branch
      %109 = sbr.rel (0) target = $region61
    $region60: #{tpu_custom_call.1} parent=1 // pred_region
      %s111 = ssub.s32 512, 512
      %112 = vsyncadd [#allocation13], %s111
      %s113 = sshll.u32 [#allocation12], 4
      %s114 = int_to_ptr.vmem [resolvable:$true] %s113
      %119 = dma.hbm_to_vmem [thread:$0]  %s14, 512, %s114, [#allocation13], 64, 64, 4
    $region61: #{tpu_custom_call.1} parent=1 // pred_fallthru
      _
    // Predicated region
    $region62: #{tpu_custom_call.1} parent=1 // pred_check
      _
    $region63: #{tpu_custom_call.1} parent=1 // pred_check_branch
      %121 = sbr.rel (0) target = $region65
    $region64: #{tpu_custom_call.1} parent=1 // pred_region
      %s123 = ssub.s32 512, 512
      %124 = vsyncadd [#allocation13], %s123
      %s125 = sshll.u32 [#allocation14], 4
      %s126 = int_to_ptr.vmem [resolvable:$true] %s125
      %131 = dma.hbm_to_vmem [thread:$0]  %s15, 512, %s126, [#allocation13], 64, 64, 4
    $region65: #{tpu_custom_call.1} parent=1 // pred_fallthru
      _
    // Predicated region
    $region66: #{tpu_custom_call.1} parent=1 // pred_check
      _
    $region67: #{tpu_custom_call.1} parent=1 // pred_check_branch
      %133 = sbr.rel (0) target = $region69
    $region68: #{tpu_custom_call.1} parent=1 // pred_region
      _
    $region69: #{tpu_custom_call.1} parent=1 // pred_fallthru
      _
    // Predicated region
    $region70: #{tpu_custom_call.1} parent=1 // pred_check
      _
    $region71: #{tpu_custom_call.1} parent=1 // pred_check_branch
      %135 = sbr.rel (0) target = $region73
    $region72: #{tpu_custom_call.1} parent=1 // pred_region
      _
    $region73: #{tpu_custom_call.1} parent=1 // pred_fallthru
      _
    // Predicated region
    $region74: #{tpu_custom_call.1} parent=1 // pred_check
      _
    $region75: #{tpu_custom_call.1} parent=1 // pred_check_branch
      %137 = sbr.rel (0) target = $region77
    $region76: #{tpu_custom_call.1} parent=1 // pred_region
      _
    $region77: #{tpu_custom_call.1} parent=1 // pred_fallthru
      _
    // Predicated region
    $region78: #{tpu_custom_call.1} parent=1 // pred_check
      _
    $region79: #{tpu_custom_call.1} parent=1 // pred_check_branch
      %139 = sbr.rel (0) target = $region81
    $region80: #{tpu_custom_call.1} parent=1 // pred_region
      _
    $region81: #{tpu_custom_call.1} parent=1 // pred_fallthru
      _
    // Predicated region
    $region82: #{tpu_custom_call.1} parent=1 // pred_check
      _
    $region83: #{tpu_custom_call.1} parent=1 // pred_check_branch
      %141 = sbr.rel (0) target = $region85
    $region84: #{tpu_custom_call.1} parent=1 // pred_region
      _
    $region85: #{tpu_custom_call.1} parent=1 // pred_fallthru
      _
    // Predicated region
    $region86: #{tpu_custom_call.1} parent=1 // pred_check
      _
    $region87: #{tpu_custom_call.1} parent=1 // pred_check_branch
      %143 = sbr.rel (0) target = $region89
    $region88: #{tpu_custom_call.1} parent=1 // pred_region
      _
    $region89: #{tpu_custom_call.1} parent=1 // pred_fallthru
      _
    // Predicated region
    $region90: #{tpu_custom_call.1} parent=1 // pred_check
      _
    $region91: #{tpu_custom_call.1} parent=1 // pred_check_branch
      %145 = sbr.rel (0) target = $region93
    $region92: #{tpu_custom_call.1} parent=1 // pred_region
      %146 = dma.done [#allocation4], 128
    $region93: #{tpu_custom_call.1} parent=1 // pred_fallthru
      _
    // Predicated region
    $region94: #{tpu_custom_call.1} parent=1 // pred_check
      _
    $region95: #{tpu_custom_call.1} parent=1 // pred_check_branch
      %148 = sbr.rel (0) target = $region97
    $region96: #{tpu_custom_call.1} parent=1 // pred_region
      %149 = dma.done [#allocation7], 1024
    $region97: #{tpu_custom_call.1} parent=1 // pred_fallthru
      _
    // Predicated region
    $region98: #{tpu_custom_call.1} parent=1 // pred_check
      _
    $region99: #{tpu_custom_call.1} parent=1 // pred_check_branch
      %151 = sbr.rel (0) target = $region101
    $region100: #{tpu_custom_call.1} parent=1 // pred_region
      %152 = dma.done [#allocation7], 512
    $region101: #{tpu_custom_call.1} parent=1 // pred_fallthru
      _
    // Predicated region
    $region102: #{tpu_custom_call.1} parent=1 // pred_check
      _
    $region103: #{tpu_custom_call.1} parent=1 // pred_check_branch
      %154 = sbr.rel (0) target = $region105
    $region104: #{tpu_custom_call.1} parent=1 // pred_region
      %155 = dma.done [#allocation10], 16
    $region105: #{tpu_custom_call.1} parent=1 // pred_fallthru
      _
    // Predicated region
    $region106: #{tpu_custom_call.1} parent=1 // pred_check
      _
    $region107: #{tpu_custom_call.1} parent=1 // pred_check_branch
      %157 = sbr.rel (0) target = $region109
    $region108: #{tpu_custom_call.1} parent=1 // pred_region
      %158 = dma.done [#allocation10], 16
    $region109: #{tpu_custom_call.1} parent=1 // pred_fallthru
      _
    // Predicated region
    $region110: #{tpu_custom_call.1} parent=1 // pred_check
      _
    $region111: #{tpu_custom_call.1} parent=1 // pred_check_branch
      %160 = sbr.rel (0) target = $region113
    $region112: #{tpu_custom_call.1} parent=1 // pred_region
      %161 = dma.done [#allocation13], 512
    $region113: #{tpu_custom_call.1} parent=1 // pred_fallthru
      _
    // Predicated region
    $region114: #{tpu_custom_call.1} parent=1 // pred_check
      _
    $region115: #{tpu_custom_call.1} parent=1 // pred_check_branch
      %163 = sbr.rel (0) target = $region117
    $region116: #{tpu_custom_call.1} parent=1 // pred_region
      %164 = dma.done [#allocation13], 512
    $region117: #{tpu_custom_call.1} parent=1 // pred_fallthru
      _
    %v166 = vld [vmem:[#allocation3] sm:$0xff]
    %v167 = vld [vmem:[#allocation6] sm:$0xff]
    %v168 = vld [vmem:[#allocation6 + $0x8] sm:$0xff]
    %v169 = vld [vmem:[#allocation6 + $0x10] sm:$0xff]
    %v170 = vld [vmem:[#allocation6 + $0x18] sm:$0xff]
    %v171 = vld [vmem:[#allocation6 + $0x20] sm:$0xff]
    %v172 = vld [vmem:[#allocation6 + $0x28] sm:$0xff]
    %v173 = vld [vmem:[#allocation6 + $0x30] sm:$0xff]
    %v174 = vld [vmem:[#allocation6 + $0x38] sm:$0xff]
    %vm175 = vcmask 785408
    %v176 = vsel %vm175, %v167, 0.0
    %v177 = vrot.slane %v176, 4
    %v178 = vadd.f32 %v176, %v177
    %v179 = vrot.slane %v178, 2
    %v180 = vadd.f32 %v178, %v179
    %v181 = vrot.slane %v180, 1
    %v182 = vadd.f32 %v180, %v181
    %v183 = vsel %vm175, %v168, 0.0
    %v184 = vrot.slane %v183, 4
    %v185 = vadd.f32 %v183, %v184
    %v186 = vrot.slane %v185, 2
    %v187 = vadd.f32 %v185, %v186
    %v188 = vrot.slane %v187, 1
    %v189 = vadd.f32 %v187, %v188
    %v190 = vsel %vm175, %v169, 0.0
    %v191 = vrot.slane %v190, 4
    %v192 = vadd.f32 %v190, %v191
    %v193 = vrot.slane %v192, 2
    %v194 = vadd.f32 %v192, %v193
    %v195 = vrot.slane %v194, 1
    %v196 = vadd.f32 %v194, %v195
    %v197 = vsel %vm175, %v170, 0.0
    %v198 = vrot.slane %v197, 4
    %v199 = vadd.f32 %v197, %v198
    %v200 = vrot.slane %v199, 2
    %v201 = vadd.f32 %v199, %v200
    %v202 = vrot.slane %v201, 1
    %v203 = vadd.f32 %v201, %v202
    %v204 = vsel %vm175, %v171, 0.0
    %v205 = vrot.slane %v204, 4
    %v206 = vadd.f32 %v204, %v205
    %v207 = vrot.slane %v206, 2
    %v208 = vadd.f32 %v206, %v207
    %v209 = vrot.slane %v208, 1
    %v210 = vadd.f32 %v208, %v209
    %v211 = vsel %vm175, %v172, 0.0
    %v212 = vrot.slane %v211, 4
    %v213 = vadd.f32 %v211, %v212
    %v214 = vrot.slane %v213, 2
    %v215 = vadd.f32 %v213, %v214
    %v216 = vrot.slane %v215, 1
    %v217 = vadd.f32 %v215, %v216
    %v218 = vsel %vm175, %v173, 0.0
    %v219 = vrot.slane %v218, 4
    %v220 = vadd.f32 %v218, %v219
    %v221 = vrot.slane %v220, 2
    %v222 = vadd.f32 %v220, %v221
    %v223 = vrot.slane %v222, 1
    %v224 = vadd.f32 %v222, %v223
    %v225 = vsel %vm175, %v174, 0.0
    %v226 = vrot.slane %v225, 4
    %v227 = vadd.f32 %v225, %v226
    %v228 = vrot.slane %v227, 2
    %v229 = vadd.f32 %v227, %v228
    %v230 = vrot.slane %v229, 1
    %v231 = vadd.f32 %v229, %v230
    %v232 = vmul.f32 %v182, 0.125
    %v233 = vmul.f32 %v189, 0.125
    %v234 = vmul.f32 %v196, 0.125
    %v235 = vmul.f32 %v203, 0.125
    %v236 = vmul.f32 %v210, 0.125
    %v237 = vmul.f32 %v217, 0.125
    %v238 = vmul.f32 %v224, 0.125
    %v239 = vmul.f32 %v231, 0.125
    %v240 = vld [vmem:[%s2] sm:$0xff]
    %v241 = vpack.c.bf16 %v166, %v166
    %v242 = vpack.c.bf16 %v232, %v232
    %v243 = vpack.c.bf16 %v233, %v233
    %v244 = vpack.c.bf16 %v234, %v234
    %v245 = vpack.c.bf16 %v235, %v235
    %v246 = vpack.c.bf16 %v236, %v236
    %v247 = vpack.c.bf16 %v237, %v237
    %v248 = vpack.c.bf16 %v238, %v238
    %v249 = vpack.c.bf16 %v239, %v239
    %v250 = vld [vmem:[#allocation8] sm:$0xf]
    %v251 = vld [vmem:[#allocation8 + $0x4] sm:$0xf]
    %v252 = vld [vmem:[#allocation8 + $0x8] sm:$0xf]
    %v253 = vld [vmem:[#allocation8 + $0xc] sm:$0xf]
    %v254 = vld [vmem:[#allocation8 + $0x10] sm:$0xf]
    %v255 = vld [vmem:[#allocation8 + $0x14] sm:$0xf]
    %v256 = vld [vmem:[#allocation8 + $0x18] sm:$0xf]
    %v257 = vld [vmem:[#allocation8 + $0x1c] sm:$0xf]
    %v258 = vld [vmem:[%s4] sm:$0xf]
    %v259 = vld [vmem:[%s4 + $0x4] sm:$0xf]
    %v260 = vld [vmem:[%s4 + $0x8] sm:$0xf]
    %v261 = vld [vmem:[%s4 + $0xc] sm:$0xf]
    %v262 = vld [vmem:[%s4 + $0x10] sm:$0xf]
    %v263 = vld [vmem:[%s4 + $0x14] sm:$0xf]
    %v264 = vld [vmem:[%s4 + $0x18] sm:$0xf]
    %v265 = vld [vmem:[%s4 + $0x1c] sm:$0xf]
    %v266 = vld [vmem:[%s4 + $0x20] sm:$0xf]
    %v267 = vld [vmem:[%s4 + $0x24] sm:$0xf]
    %v268 = vld [vmem:[%s4 + $0x28] sm:$0xf]
    %v269 = vld [vmem:[%s4 + $0x2c] sm:$0xf]
    %v278 = vunpack.c.l.b16 %v242
    %v279 = vunpack.c.l.b16 %v243
    %v280 = vunpack.c.l.b16 %v244
    %v281 = vunpack.c.l.b16 %v245
    %v282 = vunpack.c.l.b16 %v246
    %v283 = vunpack.c.l.b16 %v247
    %v284 = vunpack.c.l.b16 %v248
    %v285 = vunpack.c.l.b16 %v249
    %vm286 = vcmask 1041409
    %v287 = vsel %vm286, %v279, %v278
    %vm288 = vcmask 1042434
    %v289 = vsel %vm288, %v280, %v287
    %vm290 = vcmask 1043459
    %v291 = vsel %vm290, %v281, %v289
    %vm292 = vcmask 1044484
    %v293 = vsel %vm292, %v282, %v291
    %vm294 = vcmask 1045509
    %v295 = vsel %vm294, %v283, %v293
    %vm296 = vcmask 1046534
    %v297 = vsel %vm296, %v284, %v295
    %vm298 = vcmask 1047559
    %v299 = vsel %vm298, %v285, %v297
    %v300 = vpack.c.b16 %v299, %v299
    %v313 = vunpack.c.l.b16 %v258
    %v314 = vunpack.c.l.b16 %v259
    %v315 = vunpack.c.l.b16 %v260
    %v316 = vunpack.c.l.b16 %v261
    %v317 = vunpack.c.l.b16 %v262
    %v318 = vunpack.c.l.b16 %v263
    %v319 = vunpack.c.l.b16 %v264
    %v320 = vunpack.c.l.b16 %v265
    %v321 = vunpack.c.l.b16 %v266
    %v322 = vunpack.c.l.b16 %v267
    %v323 = vunpack.c.l.b16 %v268
    %v324 = vunpack.c.l.b16 %v269
    %v325 = vpack.c.b16 %v314, %v313
    %v326 = vpack.c.b16 %v316, %v315
    %v327 = vpack.c.b16 %v318, %v317
    %v328 = vpack.c.b16 %v320, %v319
    %v329 = vpack.c.b16 %v322, %v321
    %v330 = vpack.c.b16 %v324, %v323
    %v338 = vsel %vm175, %v300, 0
    %340 = vmatprep.subr.bf16.mxu0 0
    %341 = vmatpush1.bf16.msra.mxu0 %v325
    %342 = vmatprep.subr.bf16.mxu0 0
    %343 = vmatpush1.bf16.msra.mxu0 %v326
    %344 = vmatprep.subr.bf16.mxu0 0
    %345 = vmatpush1.bf16.msra.mxu0 %v327
    %346 = vmatprep.subr.bf16.mxu0 0
    %347 = vmatpush1.bf16.msra.mxu0 %v328
    %348 = vmatprep.subr.bf16.mxu0 0
    %349 = vmatpush1.bf16.msra.mxu0 %v329
    %350 = vmatprep.subr.bf16.mxu0 0
    %351 = vmatpush1.bf16.msra.mxu0 %v330
    %352 = vmatprep.subr.bf16.mxu0 0
    %353 = vmatpush1.bf16.msra.mxu0 0
    %354 = vmatprep.subr.bf16.mxu0 0
    %355 = vmatpush1.bf16.msra.mxu0 0
    %356 = vmatprep.subr.bf16.mxu0 0
    %357 = vmatpush1.bf16.msra.mxu0 0
    %358 = vmatprep.subr.bf16.mxu0 0
    %359 = vmatpush1.bf16.msra.mxu0 0
    %360 = vmatprep.subr.bf16.mxu0 0
    %361 = vmatpush1.bf16.msra.mxu0 0
    %362 = vmatprep.subr.bf16.mxu0 0
    %363 = vmatpush1.bf16.msra.mxu0 0
    %364 = vmatprep.subr.bf16.mxu0 0
    %365 = vmatpush1.bf16.msra.mxu0 0
    %366 = vmatprep.subr.bf16.mxu0 0
    %367 = vmatpush1.bf16.msra.mxu0 0
    %368 = vmatprep.subr.bf16.mxu0 0
    %369 = vmatpush1.bf16.msra.mxu0 0
    %370 = vmatprep.subr.bf16.mxu0 0
    %371 = vmatpush1.bf16.msra.mxu0 0
    %372 = vmatprep.mubr.bf16.mxu0 0
    %373 = vmatmul.mubr.bf16.gmra.mrb[0].mxu0 %v338
    %v374 = vpop.f32.mrb[0].mxu0
    %v375 = vadd.f32 0.0, %v374
    %v376 = vpop.f32.mrb[0].mxu0
    %v377 = vpop.f32.mrb[0].mxu0
    %v378 = vpop.f32.mrb[0].mxu0
    %379 = vdwg.mxu0
    %v388 = vunpack.c.l.b16 %v250
    %v389 = vunpack.c.l.b16 %v251
    %v390 = vunpack.c.l.b16 %v252
    %v391 = vunpack.c.l.b16 %v253
    %v392 = vunpack.c.l.b16 %v254
    %v393 = vunpack.c.l.b16 %v255
    %v394 = vunpack.c.l.b16 %v256
    %v395 = vunpack.c.l.b16 %v257
    %v396 = vpack.c.b16 %v389, %v388
    %v397 = vpack.c.b16 %v391, %v390
    %v398 = vpack.c.b16 %v393, %v392
    %v399 = vpack.c.b16 %v395, %v394
    %vm404 = vcmask 523264
    %v406 = vsel %vm404, %v241, 0
    %408 = vmatprep.subr.bf16.mxu0 0
    %409 = vmatpush1.bf16.msra.mxu0 %v396
    %410 = vmatprep.subr.bf16.mxu0 0
    %411 = vmatpush1.bf16.msra.mxu0 %v397
    %412 = vmatprep.subr.bf16.mxu0 0
    %413 = vmatpush1.bf16.msra.mxu0 %v398
    %414 = vmatprep.subr.bf16.mxu0 0
    %415 = vmatpush1.bf16.msra.mxu0 %v399
    %416 = vmatprep.subr.bf16.mxu0 0
    %417 = vmatpush1.bf16.msra.mxu0 0
    %418 = vmatprep.subr.bf16.mxu0 0
    %419 = vmatpush1.bf16.msra.mxu0 0
    %420 = vmatprep.subr.bf16.mxu0 0
    %421 = vmatpush1.bf16.msra.mxu0 0
    %422 = vmatprep.subr.bf16.mxu0 0
    %423 = vmatpush1.bf16.msra.mxu0 0
    %424 = vmatprep.subr.bf16.mxu0 0
    %425 = vmatpush1.bf16.msra.mxu0 0
    %426 = vmatprep.subr.bf16.mxu0 0
    %427 = vmatpush1.bf16.msra.mxu0 0
    %428 = vmatprep.subr.bf16.mxu0 0
    %429 = vmatpush1.bf16.msra.mxu0 0
    %430 = vmatprep.subr.bf16.mxu0 0
    %431 = vmatpush1.bf16.msra.mxu0 0
    %432 = vmatprep.subr.bf16.mxu0 0
    %433 = vmatpush1.bf16.msra.mxu0 0
    %434 = vmatprep.subr.bf16.mxu0 0
    %435 = vmatpush1.bf16.msra.mxu0 0
    %436 = vmatprep.subr.bf16.mxu0 0
    %437 = vmatpush1.bf16.msra.mxu0 0
    %438 = vmatprep.subr.bf16.mxu0 0
    %439 = vmatpush1.bf16.msra.mxu0 0
    %440 = vmatprep.mubr.bf16.mxu0 0
    %441 = vmatmul.mubr.bf16.gmra.mrb[0].mxu0 %v406
    %v442 = vpop.f32.mrb[0].mxu0
    %v443 = vadd.f32 %v375, %v442
    %v444 = vpop.f32.mrb[0].mxu0
    %v445 = vpop.f32.mrb[0].mxu0
    %v446 = vpop.f32.mrb[0].mxu0
    %447 = vdwg.mxu0
    %v448 = vld [vmem:[#allocation9] sm:$0x1]
    %v450 = vlaneseq
    %v451 = vshrl.u32 %v450, 7
    %v452 = vsub.s32 0, %v451
    %v453 = vrot.slane %v448, %v452
    %v455 = vadd.f32 %v443, %v453
    %v456 = vmax.f32 %v455, 0.0
    %v457 = vpack.c.bf16 %v456, %v456
    %v458 = vld [vmem:[%s6] sm:$0xf]
    %v459 = vld [vmem:[%s6 + $0x4] sm:$0xf]
    %v460 = vld [vmem:[%s6 + $0x8] sm:$0xf]
    %v461 = vld [vmem:[%s6 + $0xc] sm:$0xf]
    %v462 = vld [vmem:[%s6 + $0x10] sm:$0xf]
    %v463 = vld [vmem:[%s6 + $0x14] sm:$0xf]
    %v464 = vld [vmem:[%s6 + $0x18] sm:$0xf]
    %v465 = vld [vmem:[%s6 + $0x1c] sm:$0xf]
    %v466 = vld [vmem:[%s6 + $0x20] sm:$0xf]
    %v467 = vld [vmem:[%s6 + $0x24] sm:$0xf]
    %v468 = vld [vmem:[%s6 + $0x28] sm:$0xf]
    %v469 = vld [vmem:[%s6 + $0x2c] sm:$0xf]
    %v470 = vld [vmem:[%s6 + $0x30] sm:$0xf]
    %v471 = vld [vmem:[%s6 + $0x34] sm:$0xf]
    %v472 = vld [vmem:[%s6 + $0x38] sm:$0xf]
    %v473 = vld [vmem:[%s6 + $0x3c] sm:$0xf]
    %v474 = vld [vmem:[#allocation11] sm:$0x1]
    %v476 = vlaneseq
    %v477 = vshrl.u32 %v476, 7
    %v478 = vsub.s32 0, %v477
    %v479 = vrot.slane %v474, %v478
    %v497 = vunpack.c.l.b16 %v458
    %v498 = vunpack.c.l.b16 %v459
    %v499 = vunpack.c.l.b16 %v460
    %v500 = vunpack.c.l.b16 %v461
    %v501 = vunpack.c.l.b16 %v462
    %v502 = vunpack.c.l.b16 %v463
    %v503 = vunpack.c.l.b16 %v464
    %v504 = vunpack.c.l.b16 %v465
    %v505 = vunpack.c.l.b16 %v466
    %v506 = vunpack.c.l.b16 %v467
    %v507 = vunpack.c.l.b16 %v468
    %v508 = vunpack.c.l.b16 %v469
    %v509 = vunpack.c.l.b16 %v470
    %v510 = vunpack.c.l.b16 %v471
    %v511 = vunpack.c.l.b16 %v472
    %v512 = vunpack.c.l.b16 %v473
    %v513 = vpack.c.b16 %v498, %v497
    %v514 = vpack.c.b16 %v500, %v499
    %v515 = vpack.c.b16 %v502, %v501
    %v516 = vpack.c.b16 %v504, %v503
    %v517 = vpack.c.b16 %v506, %v505
    %v518 = vpack.c.b16 %v508, %v507
    %v519 = vpack.c.b16 %v510, %v509
    %v520 = vpack.c.b16 %v512, %v511
    %529 = vmatprep.subr.bf16.mxu0 0
    %530 = vmatpush1.bf16.msra.mxu0 %v513
    %531 = vmatprep.subr.bf16.mxu0 0
    %532 = vmatpush1.bf16.msra.mxu0 %v514
    %533 = vmatprep.subr.bf16.mxu0 0
    %534 = vmatpush1.bf16.msra.mxu0 %v515
    %535 = vmatprep.subr.bf16.mxu0 0
    %536 = vmatpush1.bf16.msra.mxu0 %v516
    %537 = vmatprep.subr.bf16.mxu0 0
    %538 = vmatpush1.bf16.msra.mxu0 %v517
    %539 = vmatprep.subr.bf16.mxu0 0
    %540 = vmatpush1.bf16.msra.mxu0 %v518
    %541 = vmatprep.subr.bf16.mxu0 0
    %542 = vmatpush1.bf16.msra.mxu0 %v519
    %543 = vmatprep.subr.bf16.mxu0 0
    %544 = vmatpush1.bf16.msra.mxu0 %v520
    %545 = vmatprep.subr.bf16.mxu0 0
    %546 = vmatpush1.bf16.msra.mxu0 0
    %547 = vmatprep.subr.bf16.mxu0 0
    %548 = vmatpush1.bf16.msra.mxu0 0
    %549 = vmatprep.subr.bf16.mxu0 0
    %550 = vmatpush1.bf16.msra.mxu0 0
    %551 = vmatprep.subr.bf16.mxu0 0
    %552 = vmatpush1.bf16.msra.mxu0 0
    %553 = vmatprep.subr.bf16.mxu0 0
    %554 = vmatpush1.bf16.msra.mxu0 0
    %555 = vmatprep.subr.bf16.mxu0 0
    %556 = vmatpush1.bf16.msra.mxu0 0
    %557 = vmatprep.subr.bf16.mxu0 0
    %558 = vmatpush1.bf16.msra.mxu0 0
    %559 = vmatprep.subr.bf16.mxu0 0
    %560 = vmatpush1.bf16.msra.mxu0 0
    %561 = vmatprep.mubr.bf16.mxu0 0
    %562 = vmatmul.mubr.bf16.gmra.mrb[0].mxu0 %v457
    %v563 = vpop.f32.mrb[0].mxu0
    %v564 = vadd.f32 %v479, %v563
    %v565 = vpop.f32.mrb[0].mxu0
    %v566 = vpop.f32.mrb[0].mxu0
    %v567 = vpop.f32.mrb[0].mxu0
    %568 = vdwg.mxu0
    %v569 = vmax.f32 %v564, 0.0
    %v570 = vld [vmem:[%s8] sm:$0xf]
    %v571 = vld [vmem:[%s8 + $0x4] sm:$0xf]
    %v572 = vld [vmem:[%s8 + $0x8] sm:$0xf]
    %v573 = vld [vmem:[%s8 + $0xc] sm:$0xf]
    %v574 = vld [vmem:[%s8 + $0x10] sm:$0xf]
    %v575 = vld [vmem:[%s8 + $0x14] sm:$0xf]
    %v576 = vld [vmem:[%s8 + $0x18] sm:$0xf]
    %v577 = vld [vmem:[%s8 + $0x1c] sm:$0xf]
    %v578 = vld [vmem:[%s10] sm:$0xf]
    %v579 = vld [vmem:[%s10 + $0x4] sm:$0xf]
    %v580 = vld [vmem:[%s10 + $0x8] sm:$0xf]
    %v581 = vld [vmem:[%s10 + $0xc] sm:$0xf]
    %v582 = vld [vmem:[%s10 + $0x10] sm:$0xf]
    %v583 = vld [vmem:[%s10 + $0x14] sm:$0xf]
    %v584 = vld [vmem:[%s10 + $0x18] sm:$0xf]
    %v585 = vld [vmem:[%s10 + $0x1c] sm:$0xf]
    %v586 = vld [vmem:[%s10 + $0x20] sm:$0xf]
    %v587 = vld [vmem:[%s10 + $0x24] sm:$0xf]
    %v588 = vld [vmem:[%s10 + $0x28] sm:$0xf]
    %v589 = vld [vmem:[%s10 + $0x2c] sm:$0xf]
    %v602 = vunpack.c.l.b16 %v578
    %v603 = vunpack.c.l.b16 %v579
    %v604 = vunpack.c.l.b16 %v580
    %v605 = vunpack.c.l.b16 %v581
    %v606 = vunpack.c.l.b16 %v582
    %v607 = vunpack.c.l.b16 %v583
    %v608 = vunpack.c.l.b16 %v584
    %v609 = vunpack.c.l.b16 %v585
    %v610 = vunpack.c.l.b16 %v586
    %v611 = vunpack.c.l.b16 %v587
    %v612 = vunpack.c.l.b16 %v588
    %v613 = vunpack.c.l.b16 %v589
    %v614 = vpack.c.b16 %v603, %v602
    %v615 = vpack.c.b16 %v605, %v604
    %v616 = vpack.c.b16 %v607, %v606
    %v617 = vpack.c.b16 %v609, %v608
    %v618 = vpack.c.b16 %v611, %v610
    %v619 = vpack.c.b16 %v613, %v612
    %626 = vmatprep.subr.bf16.mxu0 0
    %627 = vmatpush1.bf16.msra.mxu0 %v614
    %628 = vmatprep.subr.bf16.mxu0 0
    %629 = vmatpush1.bf16.msra.mxu0 %v615
    %630 = vmatprep.subr.bf16.mxu0 0
    %631 = vmatpush1.bf16.msra.mxu0 %v616
    %632 = vmatprep.subr.bf16.mxu0 0
    %633 = vmatpush1.bf16.msra.mxu0 %v617
    %634 = vmatprep.subr.bf16.mxu0 0
    %635 = vmatpush1.bf16.msra.mxu0 %v618
    %636 = vmatprep.subr.bf16.mxu0 0
    %637 = vmatpush1.bf16.msra.mxu0 %v619
    %638 = vmatprep.subr.bf16.mxu0 0
    %639 = vmatpush1.bf16.msra.mxu0 0
    %640 = vmatprep.subr.bf16.mxu0 0
    %641 = vmatpush1.bf16.msra.mxu0 0
    %642 = vmatprep.subr.bf16.mxu0 0
    %643 = vmatpush1.bf16.msra.mxu0 0
    %644 = vmatprep.subr.bf16.mxu0 0
    %645 = vmatpush1.bf16.msra.mxu0 0
    %646 = vmatprep.subr.bf16.mxu0 0
    %647 = vmatpush1.bf16.msra.mxu0 0
    %648 = vmatprep.subr.bf16.mxu0 0
    %649 = vmatpush1.bf16.msra.mxu0 0
    %650 = vmatprep.subr.bf16.mxu0 0
    %651 = vmatpush1.bf16.msra.mxu0 0
    %652 = vmatprep.subr.bf16.mxu0 0
    %653 = vmatpush1.bf16.msra.mxu0 0
    %654 = vmatprep.subr.bf16.mxu0 0
    %655 = vmatpush1.bf16.msra.mxu0 0
    %656 = vmatprep.subr.bf16.mxu0 0
    %657 = vmatpush1.bf16.msra.mxu0 0
    %658 = vmatprep.mubr.bf16.mxu0 0
    %659 = vmatmul.mubr.bf16.gmra.mrb[0].mxu0 %v338
    %v660 = vpop.f32.mrb[0].mxu0
    %v661 = vadd.f32 0.0, %v660
    %v662 = vpop.f32.mrb[0].mxu0
    %v663 = vpop.f32.mrb[0].mxu0
    %v664 = vpop.f32.mrb[0].mxu0
    %665 = vdwg.mxu0
    %v674 = vunpack.c.l.b16 %v570
    %v675 = vunpack.c.l.b16 %v571
    %v676 = vunpack.c.l.b16 %v572
    %v677 = vunpack.c.l.b16 %v573
    %v678 = vunpack.c.l.b16 %v574
    %v679 = vunpack.c.l.b16 %v575
    %v680 = vunpack.c.l.b16 %v576
    %v681 = vunpack.c.l.b16 %v577
    %v682 = vpack.c.b16 %v675, %v674
    %v683 = vpack.c.b16 %v677, %v676
    %v684 = vpack.c.b16 %v679, %v678
    %v685 = vpack.c.b16 %v681, %v680
    %690 = vmatprep.subr.bf16.mxu0 0
    %691 = vmatpush1.bf16.msra.mxu0 %v682
    %692 = vmatprep.subr.bf16.mxu0 0
    %693 = vmatpush1.bf16.msra.mxu0 %v683
    %694 = vmatprep.subr.bf16.mxu0 0
    %695 = vmatpush1.bf16.msra.mxu0 %v684
    %696 = vmatprep.subr.bf16.mxu0 0
    %697 = vmatpush1.bf16.msra.mxu0 %v685
    %698 = vmatprep.subr.bf16.mxu0 0
    %699 = vmatpush1.bf16.msra.mxu0 0
    %700 = vmatprep.subr.bf16.mxu0 0
    %701 = vmatpush1.bf16.msra.mxu0 0
    %702 = vmatprep.subr.bf16.mxu0 0
    %703 = vmatpush1.bf16.msra.mxu0 0
    %704 = vmatprep.subr.bf16.mxu0 0
    %705 = vmatpush1.bf16.msra.mxu0 0
    %706 = vmatprep.subr.bf16.mxu0 0
    %707 = vmatpush1.bf16.msra.mxu0 0
    %708 = vmatprep.subr.bf16.mxu0 0
    %709 = vmatpush1.bf16.msra.mxu0 0
    %710 = vmatprep.subr.bf16.mxu0 0
    %711 = vmatpush1.bf16.msra.mxu0 0
    %712 = vmatprep.subr.bf16.mxu0 0
    %713 = vmatpush1.bf16.msra.mxu0 0
    %714 = vmatprep.subr.bf16.mxu0 0
    %715 = vmatpush1.bf16.msra.mxu0 0
    %716 = vmatprep.subr.bf16.mxu0 0
    %717 = vmatpush1.bf16.msra.mxu0 0
    %718 = vmatprep.subr.bf16.mxu0 0
    %719 = vmatpush1.bf16.msra.mxu0 0
    %720 = vmatprep.subr.bf16.mxu0 0
    %721 = vmatpush1.bf16.msra.mxu0 0
    %722 = vmatprep.mubr.bf16.mxu0 0
    %723 = vmatmul.mubr.bf16.gmra.mrb[0].mxu0 %v406
    %v724 = vpop.f32.mrb[0].mxu0
    %v725 = vadd.f32 %v661, %v724
    %v726 = vpop.f32.mrb[0].mxu0
    %v727 = vpop.f32.mrb[0].mxu0
    %v728 = vpop.f32.mrb[0].mxu0
    %729 = vdwg.mxu0
    %v730 = vld [vmem:[%s12] sm:$0x1]
    %v732 = vlaneseq
    %v733 = vshrl.u32 %v732, 7
    %v734 = vsub.s32 0, %v733
    %v735 = vrot.slane %v730, %v734
    %v737 = vadd.f32 %v725, %v735
    %v738 = vld [vmem:[%s9] sm:$0xf]
    %v739 = vld [vmem:[%s9 + $0x4] sm:$0xf]
    %v740 = vld [vmem:[%s9 + $0x8] sm:$0xf]
    %v741 = vld [vmem:[%s9 + $0xc] sm:$0xf]
    %v742 = vld [vmem:[%s9 + $0x10] sm:$0xf]
    %v743 = vld [vmem:[%s9 + $0x14] sm:$0xf]
    %v744 = vld [vmem:[%s9 + $0x18] sm:$0xf]
    %v745 = vld [vmem:[%s9 + $0x1c] sm:$0xf]
    %v746 = vld [vmem:[%s11] sm:$0xf]
    %v747 = vld [vmem:[%s11 + $0x4] sm:$0xf]
    %v748 = vld [vmem:[%s11 + $0x8] sm:$0xf]
    %v749 = vld [vmem:[%s11 + $0xc] sm:$0xf]
    %v750 = vld [vmem:[%s11 + $0x10] sm:$0xf]
    %v751 = vld [vmem:[%s11 + $0x14] sm:$0xf]
    %v752 = vld [vmem:[%s11 + $0x18] sm:$0xf]
    %v753 = vld [vmem:[%s11 + $0x1c] sm:$0xf]
    %v754 = vld [vmem:[%s11 + $0x20] sm:$0xf]
    %v755 = vld [vmem:[%s11 + $0x24] sm:$0xf]
    %v756 = vld [vmem:[%s11 + $0x28] sm:$0xf]
    %v757 = vld [vmem:[%s11 + $0x2c] sm:$0xf]
    %v770 = vunpack.c.l.b16 %v746
    %v771 = vunpack.c.l.b16 %v747
    %v772 = vunpack.c.l.b16 %v748
    %v773 = vunpack.c.l.b16 %v749
    %v774 = vunpack.c.l.b16 %v750
    %v775 = vunpack.c.l.b16 %v751
    %v776 = vunpack.c.l.b16 %v752
    %v777 = vunpack.c.l.b16 %v753
    %v778 = vunpack.c.l.b16 %v754
    %v779 = vunpack.c.l.b16 %v755
    %v780 = vunpack.c.l.b16 %v756
    %v781 = vunpack.c.l.b16 %v757
    %v782 = vpack.c.b16 %v771, %v770
    %v783 = vpack.c.b16 %v773, %v772
    %v784 = vpack.c.b16 %v775, %v774
    %v785 = vpack.c.b16 %v777, %v776
    %v786 = vpack.c.b16 %v779, %v778
    %v787 = vpack.c.b16 %v781, %v780
    %794 = vmatprep.subr.bf16.mxu0 0
    %795 = vmatpush1.bf16.msra.mxu0 %v782
    %796 = vmatprep.subr.bf16.mxu0 0
    %797 = vmatpush1.bf16.msra.mxu0 %v783
    %798 = vmatprep.subr.bf16.mxu0 0
    %799 = vmatpush1.bf16.msra.mxu0 %v784
    %800 = vmatprep.subr.bf16.mxu0 0
    %801 = vmatpush1.bf16.msra.mxu0 %v785
    %802 = vmatprep.subr.bf16.mxu0 0
    %803 = vmatpush1.bf16.msra.mxu0 %v786
    %804 = vmatprep.subr.bf16.mxu0 0
    %805 = vmatpush1.bf16.msra.mxu0 %v787
    %806 = vmatprep.subr.bf16.mxu0 0
    %807 = vmatpush1.bf16.msra.mxu0 0
    %808 = vmatprep.subr.bf16.mxu0 0
    %809 = vmatpush1.bf16.msra.mxu0 0
    %810 = vmatprep.subr.bf16.mxu0 0
    %811 = vmatpush1.bf16.msra.mxu0 0
    %812 = vmatprep.subr.bf16.mxu0 0
    %813 = vmatpush1.bf16.msra.mxu0 0
    %814 = vmatprep.subr.bf16.mxu0 0
    %815 = vmatpush1.bf16.msra.mxu0 0
    %816 = vmatprep.subr.bf16.mxu0 0
    %817 = vmatpush1.bf16.msra.mxu0 0
    %818 = vmatprep.subr.bf16.mxu0 0
    %819 = vmatpush1.bf16.msra.mxu0 0
    %820 = vmatprep.subr.bf16.mxu0 0
    %821 = vmatpush1.bf16.msra.mxu0 0
    %822 = vmatprep.subr.bf16.mxu0 0
    %823 = vmatpush1.bf16.msra.mxu0 0
    %824 = vmatprep.subr.bf16.mxu0 0
    %825 = vmatpush1.bf16.msra.mxu0 0
    %826 = vmatprep.mubr.bf16.mxu0 0
    %827 = vmatmul.mubr.bf16.gmra.mrb[0].mxu0 %v338
    %v828 = vpop.f32.mrb[0].mxu0
    %v829 = vadd.f32 0.0, %v828
    %v830 = vpop.f32.mrb[0].mxu0
    %v831 = vpop.f32.mrb[0].mxu0
    %v832 = vpop.f32.mrb[0].mxu0
    %833 = vdwg.mxu0
    %v842 = vunpack.c.l.b16 %v738
    %v843 = vunpack.c.l.b16 %v739
    %v844 = vunpack.c.l.b16 %v740
    %v845 = vunpack.c.l.b16 %v741
    %v846 = vunpack.c.l.b16 %v742
    %v847 = vunpack.c.l.b16 %v743
    %v848 = vunpack.c.l.b16 %v744
    %v849 = vunpack.c.l.b16 %v745
    %v850 = vpack.c.b16 %v843, %v842
    %v851 = vpack.c.b16 %v845, %v844
    %v852 = vpack.c.b16 %v847, %v846
    %v853 = vpack.c.b16 %v849, %v848
    %858 = vmatprep.subr.bf16.mxu0 0
    %859 = vmatpush1.bf16.msra.mxu0 %v850
    %860 = vmatprep.subr.bf16.mxu0 0
    %861 = vmatpush1.bf16.msra.mxu0 %v851
    %862 = vmatprep.subr.bf16.mxu0 0
    %863 = vmatpush1.bf16.msra.mxu0 %v852
    %864 = vmatprep.subr.bf16.mxu0 0
    %865 = vmatpush1.bf16.msra.mxu0 %v853
    %866 = vmatprep.subr.bf16.mxu0 0
    %867 = vmatpush1.bf16.msra.mxu0 0
    %868 = vmatprep.subr.bf16.mxu0 0
    %869 = vmatpush1.bf16.msra.mxu0 0
    %870 = vmatprep.subr.bf16.mxu0 0
    %871 = vmatpush1.bf16.msra.mxu0 0
    %872 = vmatprep.subr.bf16.mxu0 0
    %873 = vmatpush1.bf16.msra.mxu0 0
    %874 = vmatprep.subr.bf16.mxu0 0
    %875 = vmatpush1.bf16.msra.mxu0 0
    %876 = vmatprep.subr.bf16.mxu0 0
    %877 = vmatpush1.bf16.msra.mxu0 0
    %878 = vmatprep.subr.bf16.mxu0 0
    %879 = vmatpush1.bf16.msra.mxu0 0
    %880 = vmatprep.subr.bf16.mxu0 0
    %881 = vmatpush1.bf16.msra.mxu0 0
    %882 = vmatprep.subr.bf16.mxu0 0
    %883 = vmatpush1.bf16.msra.mxu0 0
    %884 = vmatprep.subr.bf16.mxu0 0
    %885 = vmatpush1.bf16.msra.mxu0 0
    %886 = vmatprep.subr.bf16.mxu0 0
    %887 = vmatpush1.bf16.msra.mxu0 0
    %888 = vmatprep.subr.bf16.mxu0 0
    %889 = vmatpush1.bf16.msra.mxu0 0
    %890 = vmatprep.mubr.bf16.mxu0 0
    %891 = vmatmul.mubr.bf16.gmra.mrb[0].mxu0 %v406
    %v892 = vpop.f32.mrb[0].mxu0
    %v893 = vadd.f32 %v829, %v892
    %v894 = vpop.f32.mrb[0].mxu0
    %v895 = vpop.f32.mrb[0].mxu0
    %v896 = vpop.f32.mrb[0].mxu0
    %897 = vdwg.mxu0
    %v898 = vld [vmem:[%s13] sm:$0x1]
    %v900 = vlaneseq
    %v901 = vshrl.u32 %v900, 7
    %v902 = vsub.s32 0, %v901
    %v903 = vrot.slane %v898, %v902
    %v905 = vadd.f32 %v893, %v903
    %v906 = vmul.f32 %v166, %v737
    %v907 = vadd.f32 %v906, %v166
    %v909 = vrot.slane %v905, 1
    %v910 = vrot.slane %v905, 2
    %v911 = vrot.slane %v905, 3
    %v912 = vrot.slane %v905, 4
    %v913 = vrot.slane %v905, 5
    %v914 = vrot.slane %v905, 6
    %v915 = vrot.slane %v905, 7
    %v924 = vmul.f32 %v232, %v905
    %v925 = vmul.f32 %v233, %v909
    %v926 = vmul.f32 %v234, %v910
    %v927 = vmul.f32 %v235, %v911
    %v928 = vmul.f32 %v236, %v912
    %v929 = vmul.f32 %v237, %v913
    %v930 = vmul.f32 %v238, %v914
    %v931 = vmul.f32 %v239, %v915
    %v932 = vadd.f32 %v924, %v232
    %v933 = vadd.f32 %v925, %v233
    %v934 = vadd.f32 %v926, %v234
    %v935 = vadd.f32 %v927, %v235
    %v936 = vadd.f32 %v928, %v236
    %v937 = vadd.f32 %v929, %v237
    %v938 = vadd.f32 %v930, %v238
    %v939 = vadd.f32 %v931, %v239
    %v940 = vpack.c.bf16 %v907, %v907
    %v941 = vpack.c.bf16 %v932, %v932
    %v942 = vpack.c.bf16 %v933, %v933
    %v943 = vpack.c.bf16 %v934, %v934
    %v944 = vpack.c.bf16 %v935, %v935
    %v945 = vpack.c.bf16 %v936, %v936
    %v946 = vpack.c.bf16 %v937, %v937
    %v947 = vpack.c.bf16 %v938, %v938
    %v948 = vpack.c.bf16 %v939, %v939
    %s949 = scalar_lea.vmem %s8, 32
    %v950 = vld [vmem:[%s949] sm:$0xf]
    %v951 = vld [vmem:[%s949 + $0x4] sm:$0xf]
    %v952 = vld [vmem:[%s949 + $0x8] sm:$0xf]
    %v953 = vld [vmem:[%s949 + $0xc] sm:$0xf]
    %v954 = vld [vmem:[%s949 + $0x10] sm:$0xf]
    %v955 = vld [vmem:[%s949 + $0x14] sm:$0xf]
    %v956 = vld [vmem:[%s949 + $0x18] sm:$0xf]
    %v957 = vld [vmem:[%s949 + $0x1c] sm:$0xf]
    %s958 = scalar_lea.vmem %s10, 48
    %v959 = vld [vmem:[%s958] sm:$0xf]
    %v960 = vld [vmem:[%s958 + $0x4] sm:$0xf]
    %v961 = vld [vmem:[%s958 + $0x8] sm:$0xf]
    %v962 = vld [vmem:[%s958 + $0xc] sm:$0xf]
    %v963 = vld [vmem:[%s958 + $0x10] sm:$0xf]
    %v964 = vld [vmem:[%s958 + $0x14] sm:$0xf]
    %v965 = vld [vmem:[%s958 + $0x18] sm:$0xf]
    %v966 = vld [vmem:[%s958 + $0x1c] sm:$0xf]
    %v967 = vld [vmem:[%s958 + $0x20] sm:$0xf]
    %v968 = vld [vmem:[%s958 + $0x24] sm:$0xf]
    %v969 = vld [vmem:[%s958 + $0x28] sm:$0xf]
    %v970 = vld [vmem:[%s958 + $0x2c] sm:$0xf]
    %v979 = vunpack.c.l.b16 %v941
    %v980 = vunpack.c.l.b16 %v942
    %v981 = vunpack.c.l.b16 %v943
    %v982 = vunpack.c.l.b16 %v944
    %v983 = vunpack.c.l.b16 %v945
    %v984 = vunpack.c.l.b16 %v946
    %v985 = vunpack.c.l.b16 %v947
    %v986 = vunpack.c.l.b16 %v948
    %v987 = vrot.slane %v980, 7
    %v988 = vsel %vm286, %v987, %v979
    %v989 = vrot.slane %v981, 6
    %v990 = vsel %vm288, %v989, %v988
    %v991 = vrot.slane %v982, 5
    %v992 = vsel %vm290, %v991, %v990
    %v993 = vrot.slane %v983, 4
    %v994 = vsel %vm292, %v993, %v992
    %v995 = vrot.slane %v984, 3
    %v996 = vsel %vm294, %v995, %v994
    %v997 = vrot.slane %v985, 2
    %v998 = vsel %vm296, %v997, %v996
    %v999 = vrot.slane %v986, 1
    %v1000 = vsel %vm298, %v999, %v998
    %v1001 = vpack.c.b16 %v1000, %v1000
    %v1014 = vunpack.c.l.b16 %v959
    %v1015 = vunpack.c.l.b16 %v960
    %v1016 = vunpack.c.l.b16 %v961
    %v1017 = vunpack.c.l.b16 %v962
    %v1018 = vunpack.c.l.b16 %v963
    %v1019 = vunpack.c.l.b16 %v964
    %v1020 = vunpack.c.l.b16 %v965
    %v1021 = vunpack.c.l.b16 %v966
    %v1022 = vunpack.c.l.b16 %v967
    %v1023 = vunpack.c.l.b16 %v968
    %v1024 = vunpack.c.l.b16 %v969
    %v1025 = vunpack.c.l.b16 %v970
    %v1026 = vpack.c.b16 %v1015, %v1014
    %v1027 = vpack.c.b16 %v1017, %v1016
    %v1028 = vpack.c.b16 %v1019, %v1018
    %v1029 = vpack.c.b16 %v1021, %v1020
    %v1030 = vpack.c.b16 %v1023, %v1022
    %v1031 = vpack.c.b16 %v1025, %v1024
    %v1039 = vsel %vm175, %v1001, 0
    %1041 = vmatprep.subr.bf16.mxu0 0
    %1042 = vmatpush1.bf16.msra.mxu0 %v1026
    %1043 = vmatprep.subr.bf16.mxu0 0
    %1044 = vmatpush1.bf16.msra.mxu0 %v1027
    %1045 = vmatprep.subr.bf16.mxu0 0
    %1046 = vmatpush1.bf16.msra.mxu0 %v1028
    %1047 = vmatprep.subr.bf16.mxu0 0
    %1048 = vmatpush1.bf16.msra.mxu0 %v1029
    %1049 = vmatprep.subr.bf16.mxu0 0
    %1050 = vmatpush1.bf16.msra.mxu0 %v1030
    %1051 = vmatprep.subr.bf16.mxu0 0
    %1052 = vmatpush1.bf16.msra.mxu0 %v1031
    %1053 = vmatprep.subr.bf16.mxu0 0
    %1054 = vmatpush1.bf16.msra.mxu0 0
    %1055 = vmatprep.subr.bf16.mxu0 0
    %1056 = vmatpush1.bf16.msra.mxu0 0
    %1057 = vmatprep.subr.bf16.mxu0 0
    %1058 = vmatpush1.bf16.msra.mxu0 0
    %1059 = vmatprep.subr.bf16.mxu0 0
    %1060 = vmatpush1.bf16.msra.mxu0 0
    %1061 = vmatprep.subr.bf16.mxu0 0
    %1062 = vmatpush1.bf16.msra.mxu0 0
    %1063 = vmatprep.subr.bf16.mxu0 0
    %1064 = vmatpush1.bf16.msra.mxu0 0
    %1065 = vmatprep.subr.bf16.mxu0 0
    %1066 = vmatpush1.bf16.msra.mxu0 0
    %1067 = vmatprep.subr.bf16.mxu0 0
    %1068 = vmatpush1.bf16.msra.mxu0 0
    %1069 = vmatprep.subr.bf16.mxu0 0
    %1070 = vmatpush1.bf16.msra.mxu0 0
    %1071 = vmatprep.subr.bf16.mxu0 0
    %1072 = vmatpush1.bf16.msra.mxu0 0
    %1073 = vmatprep.mubr.bf16.mxu0 0
    %1074 = vmatmul.mubr.bf16.gmra.mrb[0].mxu0 %v1039
    %v1075 = vpop.f32.mrb[0].mxu0
    %v1076 = vadd.f32 0.0, %v1075
    %v1077 = vpop.f32.mrb[0].mxu0
    %v1078 = vpop.f32.mrb[0].mxu0
    %v1079 = vpop.f32.mrb[0].mxu0
    %1080 = vdwg.mxu0
    %v1089 = vunpack.c.l.b16 %v950
    %v1090 = vunpack.c.l.b16 %v951
    %v1091 = vunpack.c.l.b16 %v952
    %v1092 = vunpack.c.l.b16 %v953
    %v1093 = vunpack.c.l.b16 %v954
    %v1094 = vunpack.c.l.b16 %v955
    %v1095 = vunpack.c.l.b16 %v956
    %v1096 = vunpack.c.l.b16 %v957
    %v1097 = vpack.c.b16 %v1090, %v1089
    %v1098 = vpack.c.b16 %v1092, %v1091
    %v1099 = vpack.c.b16 %v1094, %v1093
    %v1100 = vpack.c.b16 %v1096, %v1095
    %v1106 = vsel %vm404, %v940, 0
    %1108 = vmatprep.subr.bf16.mxu0 0
    %1109 = vmatpush1.bf16.msra.mxu0 %v1097
    %1110 = vmatprep.subr.bf16.mxu0 0
    %1111 = vmatpush1.bf16.msra.mxu0 %v1098
    %1112 = vmatprep.subr.bf16.mxu0 0
    %1113 = vmatpush1.bf16.msra.mxu0 %v1099
    %1114 = vmatprep.subr.bf16.mxu0 0
    %1115 = vmatpush1.bf16.msra.mxu0 %v1100
    %1116 = vmatprep.subr.bf16.mxu0 0
    %1117 = vmatpush1.bf16.msra.mxu0 0
    %1118 = vmatprep.subr.bf16.mxu0 0
    %1119 = vmatpush1.bf16.msra.mxu0 0
    %1120 = vmatprep.subr.bf16.mxu0 0
    %1121 = vmatpush1.bf16.msra.mxu0 0
    %1122 = vmatprep.subr.bf16.mxu0 0
    %1123 = vmatpush1.bf16.msra.mxu0 0
    %1124 = vmatprep.subr.bf16.mxu0 0
    %1125 = vmatpush1.bf16.msra.mxu0 0
    %1126 = vmatprep.subr.bf16.mxu0 0
    %1127 = vmatpush1.bf16.msra.mxu0 0
    %1128 = vmatprep.subr.bf16.mxu0 0
    %1129 = vmatpush1.bf16.msra.mxu0 0
    %1130 = vmatprep.subr.bf16.mxu0 0
    %1131 = vmatpush1.bf16.msra.mxu0 0
    %1132 = vmatprep.subr.bf16.mxu0 0
    %1133 = vmatpush1.bf16.msra.mxu0 0
    %1134 = vmatprep.subr.bf16.mxu0 0
    %1135 = vmatpush1.bf16.msra.mxu0 0
    %1136 = vmatprep.subr.bf16.mxu0 0
    %1137 = vmatpush1.bf16.msra.mxu0 0
    %1138 = vmatprep.subr.bf16.mxu0 0
    %1139 = vmatpush1.bf16.msra.mxu0 0
    %1140 = vmatprep.mubr.bf16.mxu0 0
    %1141 = vmatmul.mubr.bf16.gmra.mrb[0].mxu0 %v1106
    %v1142 = vpop.f32.mrb[0].mxu0
    %v1143 = vadd.f32 %v1076, %v1142
    %v1144 = vpop.f32.mrb[0].mxu0
    %v1145 = vpop.f32.mrb[0].mxu0
    %v1146 = vpop.f32.mrb[0].mxu0
    %1147 = vdwg.mxu0
    %s1148 = scalar_lea.vmem %s12, 1
    %v1149 = vld [vmem:[%s1148] sm:$0x1]
    %v1151 = vlaneseq
    %v1152 = vshrl.u32 %v1151, 7
    %v1153 = vsub.s32 0, %v1152
    %v1154 = vrot.slane %v1149, %v1153
    %v1156 = vadd.f32 %v1143, %v1154
    %s1157 = scalar_lea.vmem %s9, 32
    %v1158 = vld [vmem:[%s1157] sm:$0xf]
    %v1159 = vld [vmem:[%s1157 + $0x4] sm:$0xf]
    %v1160 = vld [vmem:[%s1157 + $0x8] sm:$0xf]
    %v1161 = vld [vmem:[%s1157 + $0xc] sm:$0xf]
    %v1162 = vld [vmem:[%s1157 + $0x10] sm:$0xf]
    %v1163 = vld [vmem:[%s1157 + $0x14] sm:$0xf]
    %v1164 = vld [vmem:[%s1157 + $0x18] sm:$0xf]
    %v1165 = vld [vmem:[%s1157 + $0x1c] sm:$0xf]
    %s1166 = scalar_lea.vmem %s11, 48
    %v1167 = vld [vmem:[%s1166] sm:$0xf]
    %v1168 = vld [vmem:[%s1166 + $0x4] sm:$0xf]
    %v1169 = vld [vmem:[%s1166 + $0x8] sm:$0xf]
    %v1170 = vld [vmem:[%s1166 + $0xc] sm:$0xf]
    %v1171 = vld [vmem:[%s1166 + $0x10] sm:$0xf]
    %v1172 = vld [vmem:[%s1166 + $0x14] sm:$0xf]
    %v1173 = vld [vmem:[%s1166 + $0x18] sm:$0xf]
    %v1174 = vld [vmem:[%s1166 + $0x1c] sm:$0xf]
    %v1175 = vld [vmem:[%s1166 + $0x20] sm:$0xf]
    %v1176 = vld [vmem:[%s1166 + $0x24] sm:$0xf]
    %v1177 = vld [vmem:[%s1166 + $0x28] sm:$0xf]
    %v1178 = vld [vmem:[%s1166 + $0x2c] sm:$0xf]
    %v1191 = vunpack.c.l.b16 %v1167
    %v1192 = vunpack.c.l.b16 %v1168
    %v1193 = vunpack.c.l.b16 %v1169
    %v1194 = vunpack.c.l.b16 %v1170
    %v1195 = vunpack.c.l.b16 %v1171
    %v1196 = vunpack.c.l.b16 %v1172
    %v1197 = vunpack.c.l.b16 %v1173
    %v1198 = vunpack.c.l.b16 %v1174
    %v1199 = vunpack.c.l.b16 %v1175
    %v1200 = vunpack.c.l.b16 %v1176
    %v1201 = vunpack.c.l.b16 %v1177
    %v1202 = vunpack.c.l.b16 %v1178
    %v1203 = vpack.c.b16 %v1192, %v1191
    %v1204 = vpack.c.b16 %v1194, %v1193
    %v1205 = vpack.c.b16 %v1196, %v1195
    %v1206 = vpack.c.b16 %v1198, %v1197
    %v1207 = vpack.c.b16 %v1200, %v1199
    %v1208 = vpack.c.b16 %v1202, %v1201
    %1215 = vmatprep.subr.bf16.mxu0 0
    %1216 = vmatpush1.bf16.msra.mxu0 %v1203
    %1217 = vmatprep.subr.bf16.mxu0 0
    %1218 = vmatpush1.bf16.msra.mxu0 %v1204
    %1219 = vmatprep.subr.bf16.mxu0 0
    %1220 = vmatpush1.bf16.msra.mxu0 %v1205
    %1221 = vmatprep.subr.bf16.mxu0 0
    %1222 = vmatpush1.bf16.msra.mxu0 %v1206
    %1223 = vmatprep.subr.bf16.mxu0 0
    %1224 = vmatpush1.bf16.msra.mxu0 %v1207
    %1225 = vmatprep.subr.bf16.mxu0 0
    %1226 = vmatpush1.bf16.msra.mxu0 %v1208
    %1227 = vmatprep.subr.bf16.mxu0 0
    %1228 = vmatpush1.bf16.msra.mxu0 0
    %1229 = vmatprep.subr.bf16.mxu0 0
    %1230 = vmatpush1.bf16.msra.mxu0 0
    %1231 = vmatprep.subr.bf16.mxu0 0
    %1232 = vmatpush1.bf16.msra.mxu0 0
    %1233 = vmatprep.subr.bf16.mxu0 0
    %1234 = vmatpush1.bf16.msra.mxu0 0
    %1235 = vmatprep.subr.bf16.mxu0 0
    %1236 = vmatpush1.bf16.msra.mxu0 0
    %1237 = vmatprep.subr.bf16.mxu0 0
    %1238 = vmatpush1.bf16.msra.mxu0 0
    %1239 = vmatprep.subr.bf16.mxu0 0
    %1240 = vmatpush1.bf16.msra.mxu0 0
    %1241 = vmatprep.subr.bf16.mxu0 0
    %1242 = vmatpush1.bf16.msra.mxu0 0
    %1243 = vmatprep.subr.bf16.mxu0 0
    %1244 = vmatpush1.bf16.msra.mxu0 0
    %1245 = vmatprep.subr.bf16.mxu0 0
    %1246 = vmatpush1.bf16.msra.mxu0 0
    %1247 = vmatprep.mubr.bf16.mxu0 0
    %1248 = vmatmul.mubr.bf16.gmra.mrb[0].mxu0 %v1039
    %v1249 = vpop.f32.mrb[0].mxu0
    %v1250 = vadd.f32 0.0, %v1249
    %v1251 = vpop.f32.mrb[0].mxu0
    %v1252 = vpop.f32.mrb[0].mxu0
    %v1253 = vpop.f32.mrb[0].mxu0
    %1254 = vdwg.mxu0
    %v1263 = vunpack.c.l.b16 %v1158
    %v1264 = vunpack.c.l.b16 %v1159
    %v1265 = vunpack.c.l.b16 %v1160
    %v1266 = vunpack.c.l.b16 %v1161
    %v1267 = vunpack.c.l.b16 %v1162
    %v1268 = vunpack.c.l.b16 %v1163
    %v1269 = vunpack.c.l.b16 %v1164
    %v1270 = vunpack.c.l.b16 %v1165
    %v1271 = vpack.c.b16 %v1264, %v1263
    %v1272 = vpack.c.b16 %v1266, %v1265
    %v1273 = vpack.c.b16 %v1268, %v1267
    %v1274 = vpack.c.b16 %v1270, %v1269
    %1279 = vmatprep.subr.bf16.mxu0 0
    %1280 = vmatpush1.bf16.msra.mxu0 %v1271
    %1281 = vmatprep.subr.bf16.mxu0 0
    %1282 = vmatpush1.bf16.msra.mxu0 %v1272
    %1283 = vmatprep.subr.bf16.mxu0 0
    %1284 = vmatpush1.bf16.msra.mxu0 %v1273
    %1285 = vmatprep.subr.bf16.mxu0 0
    %1286 = vmatpush1.bf16.msra.mxu0 %v1274
    %1287 = vmatprep.subr.bf16.mxu0 0
    %1288 = vmatpush1.bf16.msra.mxu0 0
    %1289 = vmatprep.subr.bf16.mxu0 0
    %1290 = vmatpush1.bf16.msra.mxu0 0
    %1291 = vmatprep.subr.bf16.mxu0 0
    %1292 = vmatpush1.bf16.msra.mxu0 0
    %1293 = vmatprep.subr.bf16.mxu0 0
    %1294 = vmatpush1.bf16.msra.mxu0 0
    %1295 = vmatprep.subr.bf16.mxu0 0
    %1296 = vmatpush1.bf16.msra.mxu0 0
    %1297 = vmatprep.subr.bf16.mxu0 0
    %1298 = vmatpush1.bf16.msra.mxu0 0
    %1299 = vmatprep.subr.bf16.mxu0 0
    %1300 = vmatpush1.bf16.msra.mxu0 0
    %1301 = vmatprep.subr.bf16.mxu0 0
    %1302 = vmatpush1.bf16.msra.mxu0 0
    %1303 = vmatprep.subr.bf16.mxu0 0
    %1304 = vmatpush1.bf16.msra.mxu0 0
    %1305 = vmatprep.subr.bf16.mxu0 0
    %1306 = vmatpush1.bf16.msra.mxu0 0
    %1307 = vmatprep.subr.bf16.mxu0 0
    %1308 = vmatpush1.bf16.msra.mxu0 0
    %1309 = vmatprep.subr.bf16.mxu0 0
    %1310 = vmatpush1.bf16.msra.mxu0 0
    %1311 = vmatprep.mubr.bf16.mxu0 0
    %1312 = vmatmul.mubr.bf16.gmra.mrb[0].mxu0 %v1106
    %v1313 = vpop.f32.mrb[0].mxu0
    %v1314 = vadd.f32 %v1250, %v1313
    %v1315 = vpop.f32.mrb[0].mxu0
    %v1316 = vpop.f32.mrb[0].mxu0
    %v1317 = vpop.f32.mrb[0].mxu0
    %1318 = vdwg.mxu0
    %s1319 = scalar_lea.vmem %s13, 1
    %v1320 = vld [vmem:[%s1319] sm:$0x1]
    %v1322 = vlaneseq
    %v1323 = vshrl.u32 %v1322, 7
    %v1324 = vsub.s32 0, %v1323
    %v1325 = vrot.slane %v1320, %v1324
    %v1327 = vadd.f32 %v1314, %v1325
    %v1328 = vmul.f32 %v166, %v1156
    %v1329 = vadd.f32 %v1328, %v907
    %v1331 = vrot.slane %v1327, 1
    %v1332 = vrot.slane %v1327, 2
    %v1333 = vrot.slane %v1327, 3
    %v1334 = vrot.slane %v1327, 4
    %v1335 = vrot.slane %v1327, 5
    %v1336 = vrot.slane %v1327, 6
    %v1337 = vrot.slane %v1327, 7
    %v1346 = vmul.f32 %v232, %v1327
    %v1347 = vmul.f32 %v233, %v1331
    %v1348 = vmul.f32 %v234, %v1332
    %v1349 = vmul.f32 %v235, %v1333
    %v1350 = vmul.f32 %v236, %v1334
    %v1351 = vmul.f32 %v237, %v1335
    %v1352 = vmul.f32 %v238, %v1336
    %v1353 = vmul.f32 %v239, %v1337
    %v1354 = vadd.f32 %v1346, %v932
    %v1355 = vadd.f32 %v1347, %v933
    %v1356 = vadd.f32 %v1348, %v934
    %v1357 = vadd.f32 %v1349, %v935
    %v1358 = vadd.f32 %v1350, %v936
    %v1359 = vadd.f32 %v1351, %v937
    %v1360 = vadd.f32 %v1352, %v938
    %v1361 = vadd.f32 %v1353, %v939
    %v1362 = vpack.c.bf16 %v1329, %v1329
    %v1363 = vpack.c.bf16 %v1354, %v1354
    %v1364 = vpack.c.bf16 %v1355, %v1355
    %v1365 = vpack.c.bf16 %v1356, %v1356
    %v1366 = vpack.c.bf16 %v1357, %v1357
    %v1367 = vpack.c.bf16 %v1358, %v1358
    %v1368 = vpack.c.bf16 %v1359, %v1359
    %v1369 = vpack.c.bf16 %v1360, %v1360
    %v1370 = vpack.c.bf16 %v1361, %v1361
    %s1371 = scalar_lea.vmem %s8, 64
    %v1372 = vld [vmem:[%s1371] sm:$0xf]
    %v1373 = vld [vmem:[%s1371 + $0x4] sm:$0xf]
    %v1374 = vld [vmem:[%s1371 + $0x8] sm:$0xf]
    %v1375 = vld [vmem:[%s1371 + $0xc] sm:$0xf]
    %v1376 = vld [vmem:[%s1371 + $0x10] sm:$0xf]
    %v1377 = vld [vmem:[%s1371 + $0x14] sm:$0xf]
    %v1378 = vld [vmem:[%s1371 + $0x18] sm:$0xf]
    %v1379 = vld [vmem:[%s1371 + $0x1c] sm:$0xf]
    %s1380 = scalar_lea.vmem %s10, 96
    %v1381 = vld [vmem:[%s1380] sm:$0xf]
    %v1382 = vld [vmem:[%s1380 + $0x4] sm:$0xf]
    %v1383 = vld [vmem:[%s1380 + $0x8] sm:$0xf]
    %v1384 = vld [vmem:[%s1380 + $0xc] sm:$0xf]
    %v1385 = vld [vmem:[%s1380 + $0x10] sm:$0xf]
    %v1386 = vld [vmem:[%s1380 + $0x14] sm:$0xf]
    %v1387 = vld [vmem:[%s1380 + $0x18] sm:$0xf]
    %v1388 = vld [vmem:[%s1380 + $0x1c] sm:$0xf]
    %v1389 = vld [vmem:[%s1380 + $0x20] sm:$0xf]
    %v1390 = vld [vmem:[%s1380 + $0x24] sm:$0xf]
    %v1391 = vld [vmem:[%s1380 + $0x28] sm:$0xf]
    %v1392 = vld [vmem:[%s1380 + $0x2c] sm:$0xf]
    %v1401 = vunpack.c.l.b16 %v1363
    %v1402 = vunpack.c.l.b16 %v1364
    %v1403 = vunpack.c.l.b16 %v1365
    %v1404 = vunpack.c.l.b16 %v1366
    %v1405 = vunpack.c.l.b16 %v1367
    %v1406 = vunpack.c.l.b16 %v1368
    %v1407 = vunpack.c.l.b16 %v1369
    %v1408 = vunpack.c.l.b16 %v1370
    %v1409 = vrot.slane %v1402, 7
    %v1410 = vsel %vm286, %v1409, %v1401
    %v1411 = vrot.slane %v1403, 6
    %v1412 = vsel %vm288, %v1411, %v1410
    %v1413 = vrot.slane %v1404, 5
    %v1414 = vsel %vm290, %v1413, %v1412
    %v1415 = vrot.slane %v1405, 4
    %v1416 = vsel %vm292, %v1415, %v1414
    %v1417 = vrot.slane %v1406, 3
    %v1418 = vsel %vm294, %v1417, %v1416
    %v1419 = vrot.slane %v1407, 2
    %v1420 = vsel %vm296, %v1419, %v1418
    %v1421 = vrot.slane %v1408, 1
    %v1422 = vsel %vm298, %v1421, %v1420
    %v1423 = vpack.c.b16 %v1422, %v1422
    %v1436 = vunpack.c.l.b16 %v1381
    %v1437 = vunpack.c.l.b16 %v1382
    %v1438 = vunpack.c.l.b16 %v1383
    %v1439 = vunpack.c.l.b16 %v1384
    %v1440 = vunpack.c.l.b16 %v1385
    %v1441 = vunpack.c.l.b16 %v1386
    %v1442 = vunpack.c.l.b16 %v1387
    %v1443 = vunpack.c.l.b16 %v1388
    %v1444 = vunpack.c.l.b16 %v1389
    %v1445 = vunpack.c.l.b16 %v1390
    %v1446 = vunpack.c.l.b16 %v1391
    %v1447 = vunpack.c.l.b16 %v1392
    %v1448 = vpack.c.b16 %v1437, %v1436
    %v1449 = vpack.c.b16 %v1439, %v1438
    %v1450 = vpack.c.b16 %v1441, %v1440
    %v1451 = vpack.c.b16 %v1443, %v1442
    %v1452 = vpack.c.b16 %v1445, %v1444
    %v1453 = vpack.c.b16 %v1447, %v1446
    %v1461 = vsel %vm175, %v1423, 0
    %1463 = vmatprep.subr.bf16.mxu0 0
    %1464 = vmatpush1.bf16.msra.mxu0 %v1448
    %1465 = vmatprep.subr.bf16.mxu0 0
    %1466 = vmatpush1.bf16.msra.mxu0 %v1449
    %1467 = vmatprep.subr.bf16.mxu0 0
    %1468 = vmatpush1.bf16.msra.mxu0 %v1450
    %1469 = vmatprep.subr.bf16.mxu0 0
    %1470 = vmatpush1.bf16.msra.mxu0 %v1451
    %1471 = vmatprep.subr.bf16.mxu0 0
    %1472 = vmatpush1.bf16.msra.mxu0 %v1452
    %1473 = vmatprep.subr.bf16.mxu0 0
    %1474 = vmatpush1.bf16.msra.mxu0 %v1453
    %1475 = vmatprep.subr.bf16.mxu0 0
    %1476 = vmatpush1.bf16.msra.mxu0 0
    %1477 = vmatprep.subr.bf16.mxu0 0
    %1478 = vmatpush1.bf16.msra.mxu0 0
    %1479 = vmatprep.subr.bf16.mxu0 0
    %1480 = vmatpush1.bf16.msra.mxu0 0
    %1481 = vmatprep.subr.bf16.mxu0 0
    %1482 = vmatpush1.bf16.msra.mxu0 0
    %1483 = vmatprep.subr.bf16.mxu0 0
    %1484 = vmatpush1.bf16.msra.mxu0 0
    %1485 = vmatprep.subr.bf16.mxu0 0
    %1486 = vmatpush1.bf16.msra.mxu0 0
    %1487 = vmatprep.subr.bf16.mxu0 0
    %1488 = vmatpush1.bf16.msra.mxu0 0
    %1489 = vmatprep.subr.bf16.mxu0 0
    %1490 = vmatpush1.bf16.msra.mxu0 0
    %1491 = vmatprep.subr.bf16.mxu0 0
    %1492 = vmatpush1.bf16.msra.mxu0 0
    %1493 = vmatprep.subr.bf16.mxu0 0
    %1494 = vmatpush1.bf16.msra.mxu0 0
    %1495 = vmatprep.mubr.bf16.mxu0 0
    %1496 = vmatmul.mubr.bf16.gmra.mrb[0].mxu0 %v1461
    %v1497 = vpop.f32.mrb[0].mxu0
    %v1498 = vadd.f32 0.0, %v1497
    %v1499 = vpop.f32.mrb[0].mxu0
    %v1500 = vpop.f32.mrb[0].mxu0
    %v1501 = vpop.f32.mrb[0].mxu0
    %1502 = vdwg.mxu0
    %v1511 = vunpack.c.l.b16 %v1372
    %v1512 = vunpack.c.l.b16 %v1373
    %v1513 = vunpack.c.l.b16 %v1374
    %v1514 = vunpack.c.l.b16 %v1375
    %v1515 = vunpack.c.l.b16 %v1376
    %v1516 = vunpack.c.l.b16 %v1377
    %v1517 = vunpack.c.l.b16 %v1378
    %v1518 = vunpack.c.l.b16 %v1379
    %v1519 = vpack.c.b16 %v1512, %v1511
    %v1520 = vpack.c.b16 %v1514, %v1513
    %v1521 = vpack.c.b16 %v1516, %v1515
    %v1522 = vpack.c.b16 %v1518, %v1517
    %v1528 = vsel %vm404, %v1362, 0
    %1530 = vmatprep.subr.bf16.mxu0 0
    %1531 = vmatpush1.bf16.msra.mxu0 %v1519
    %1532 = vmatprep.subr.bf16.mxu0 0
    %1533 = vmatpush1.bf16.msra.mxu0 %v1520
    %1534 = vmatprep.subr.bf16.mxu0 0
    %1535 = vmatpush1.bf16.msra.mxu0 %v1521
    %1536 = vmatprep.subr.bf16.mxu0 0
    %1537 = vmatpush1.bf16.msra.mxu0 %v1522
    %1538 = vmatprep.subr.bf16.mxu0 0
    %1539 = vmatpush1.bf16.msra.mxu0 0
    %1540 = vmatprep.subr.bf16.mxu0 0
    %1541 = vmatpush1.bf16.msra.mxu0 0
    %1542 = vmatprep.subr.bf16.mxu0 0
    %1543 = vmatpush1.bf16.msra.mxu0 0
    %1544 = vmatprep.subr.bf16.mxu0 0
    %1545 = vmatpush1.bf16.msra.mxu0 0
    %1546 = vmatprep.subr.bf16.mxu0 0
    %1547 = vmatpush1.bf16.msra.mxu0 0
    %1548 = vmatprep.subr.bf16.mxu0 0
    %1549 = vmatpush1.bf16.msra.mxu0 0
    %1550 = vmatprep.subr.bf16.mxu0 0
    %1551 = vmatpush1.bf16.msra.mxu0 0
    %1552 = vmatprep.subr.bf16.mxu0 0
    %1553 = vmatpush1.bf16.msra.mxu0 0
    %1554 = vmatprep.subr.bf16.mxu0 0
    %1555 = vmatpush1.bf16.msra.mxu0 0
    %1556 = vmatprep.subr.bf16.mxu0 0
    %1557 = vmatpush1.bf16.msra.mxu0 0
    %1558 = vmatprep.subr.bf16.mxu0 0
    %1559 = vmatpush1.bf16.msra.mxu0 0
    %1560 = vmatprep.subr.bf16.mxu0 0
    %1561 = vmatpush1.bf16.msra.mxu0 0
    %1562 = vmatprep.mubr.bf16.mxu0 0
    %1563 = vmatmul.mubr.bf16.gmra.mrb[0].mxu0 %v1528
    %v1564 = vpop.f32.mrb[0].mxu0
    %v1565 = vadd.f32 %v1498, %v1564
    %v1566 = vpop.f32.mrb[0].mxu0
    %v1567 = vpop.f32.mrb[0].mxu0
    %v1568 = vpop.f32.mrb[0].mxu0
    %1569 = vdwg.mxu0
    %s1570 = scalar_lea.vmem %s12, 2
    %v1571 = vld [vmem:[%s1570] sm:$0x1]
    %v1573 = vlaneseq
    %v1574 = vshrl.u32 %v1573, 7
    %v1575 = vsub.s32 0, %v1574
    %v1576 = vrot.slane %v1571, %v1575
    %v1578 = vadd.f32 %v1565, %v1576
    %s1579 = scalar_lea.vmem %s9, 64
    %v1580 = vld [vmem:[%s1579] sm:$0xf]
    %v1581 = vld [vmem:[%s1579 + $0x4] sm:$0xf]
    %v1582 = vld [vmem:[%s1579 + $0x8] sm:$0xf]
    %v1583 = vld [vmem:[%s1579 + $0xc] sm:$0xf]
    %v1584 = vld [vmem:[%s1579 + $0x10] sm:$0xf]
    %v1585 = vld [vmem:[%s1579 + $0x14] sm:$0xf]
    %v1586 = vld [vmem:[%s1579 + $0x18] sm:$0xf]
    %v1587 = vld [vmem:[%s1579 + $0x1c] sm:$0xf]
    %s1588 = scalar_lea.vmem %s11, 96
    %v1589 = vld [vmem:[%s1588] sm:$0xf]
    %v1590 = vld [vmem:[%s1588 + $0x4] sm:$0xf]
    %v1591 = vld [vmem:[%s1588 + $0x8] sm:$0xf]
    %v1592 = vld [vmem:[%s1588 + $0xc] sm:$0xf]
    %v1593 = vld [vmem:[%s1588 + $0x10] sm:$0xf]
    %v1594 = vld [vmem:[%s1588 + $0x14] sm:$0xf]
    %v1595 = vld [vmem:[%s1588 + $0x18] sm:$0xf]
    %v1596 = vld [vmem:[%s1588 + $0x1c] sm:$0xf]
    %v1597 = vld [vmem:[%s1588 + $0x20] sm:$0xf]
    %v1598 = vld [vmem:[%s1588 + $0x24] sm:$0xf]
    %v1599 = vld [vmem:[%s1588 + $0x28] sm:$0xf]
    %v1600 = vld [vmem:[%s1588 + $0x2c] sm:$0xf]
    %v1613 = vunpack.c.l.b16 %v1589
    %v1614 = vunpack.c.l.b16 %v1590
    %v1615 = vunpack.c.l.b16 %v1591
    %v1616 = vunpack.c.l.b16 %v1592
    %v1617 = vunpack.c.l.b16 %v1593
    %v1618 = vunpack.c.l.b16 %v1594
    %v1619 = vunpack.c.l.b16 %v1595
    %v1620 = vunpack.c.l.b16 %v1596
    %v1621 = vunpack.c.l.b16 %v1597
    %v1622 = vunpack.c.l.b16 %v1598
    %v1623 = vunpack.c.l.b16 %v1599
    %v1624 = vunpack.c.l.b16 %v1600
    %v1625 = vpack.c.b16 %v1614, %v1613
    %v1626 = vpack.c.b16 %v1616, %v1615
    %v1627 = vpack.c.b16 %v1618, %v1617
    %v1628 = vpack.c.b16 %v1620, %v1619
    %v1629 = vpack.c.b16 %v1622, %v1621
    %v1630 = vpack.c.b16 %v1624, %v1623
    %1637 = vmatprep.subr.bf16.mxu0 0
    %1638 = vmatpush1.bf16.msra.mxu0 %v1625
    %1639 = vmatprep.subr.bf16.mxu0 0
    %1640 = vmatpush1.bf16.msra.mxu0 %v1626
    %1641 = vmatprep.subr.bf16.mxu0 0
    %1642 = vmatpush1.bf16.msra.mxu0 %v1627
    %1643 = vmatprep.subr.bf16.mxu0 0
    %1644 = vmatpush1.bf16.msra.mxu0 %v1628
    %1645 = vmatprep.subr.bf16.mxu0 0
    %1646 = vmatpush1.bf16.msra.mxu0 %v1629
    %1647 = vmatprep.subr.bf16.mxu0 0
    %1648 = vmatpush1.bf16.msra.mxu0 %v1630
    %1649 = vmatprep.subr.bf16.mxu0 0
    %1650 = vmatpush1.bf16.msra.mxu0 0
    %1651 = vmatprep.subr.bf16.mxu0 0
    %1652 = vmatpush1.bf16.msra.mxu0 0
    %1653 = vmatprep.subr.bf16.mxu0 0
    %1654 = vmatpush1.bf16.msra.mxu0 0
    %1655 = vmatprep.subr.bf16.mxu0 0
    %1656 = vmatpush1.bf16.msra.mxu0 0
    %1657 = vmatprep.subr.bf16.mxu0 0
    %1658 = vmatpush1.bf16.msra.mxu0 0
    %1659 = vmatprep.subr.bf16.mxu0 0
    %1660 = vmatpush1.bf16.msra.mxu0 0
    %1661 = vmatprep.subr.bf16.mxu0 0
    %1662 = vmatpush1.bf16.msra.mxu0 0
    %1663 = vmatprep.subr.bf16.mxu0 0
    %1664 = vmatpush1.bf16.msra.mxu0 0
    %1665 = vmatprep.subr.bf16.mxu0 0
    %1666 = vmatpush1.bf16.msra.mxu0 0
    %1667 = vmatprep.subr.bf16.mxu0 0
    %1668 = vmatpush1.bf16.msra.mxu0 0
    %1669 = vmatprep.mubr.bf16.mxu0 0
    %1670 = vmatmul.mubr.bf16.gmra.mrb[0].mxu0 %v1461
    %v1671 = vpop.f32.mrb[0].mxu0
    %v1672 = vadd.f32 0.0, %v1671
    %v1673 = vpop.f32.mrb[0].mxu0
    %v1674 = vpop.f32.mrb[0].mxu0
    %v1675 = vpop.f32.mrb[0].mxu0
    %1676 = vdwg.mxu0
    %v1685 = vunpack.c.l.b16 %v1580
    %v1686 = vunpack.c.l.b16 %v1581
    %v1687 = vunpack.c.l.b16 %v1582
    %v1688 = vunpack.c.l.b16 %v1583
    %v1689 = vunpack.c.l.b16 %v1584
    %v1690 = vunpack.c.l.b16 %v1585
    %v1691 = vunpack.c.l.b16 %v1586
    %v1692 = vunpack.c.l.b16 %v1587
    %v1693 = vpack.c.b16 %v1686, %v1685
    %v1694 = vpack.c.b16 %v1688, %v1687
    %v1695 = vpack.c.b16 %v1690, %v1689
    %v1696 = vpack.c.b16 %v1692, %v1691
    %1701 = vmatprep.subr.bf16.mxu0 0
    %1702 = vmatpush1.bf16.msra.mxu0 %v1693
    %1703 = vmatprep.subr.bf16.mxu0 0
    %1704 = vmatpush1.bf16.msra.mxu0 %v1694
    %1705 = vmatprep.subr.bf16.mxu0 0
    %1706 = vmatpush1.bf16.msra.mxu0 %v1695
    %1707 = vmatprep.subr.bf16.mxu0 0
    %1708 = vmatpush1.bf16.msra.mxu0 %v1696
    %1709 = vmatprep.subr.bf16.mxu0 0
    %1710 = vmatpush1.bf16.msra.mxu0 0
    %1711 = vmatprep.subr.bf16.mxu0 0
    %1712 = vmatpush1.bf16.msra.mxu0 0
    %1713 = vmatprep.subr.bf16.mxu0 0
    %1714 = vmatpush1.bf16.msra.mxu0 0
    %1715 = vmatprep.subr.bf16.mxu0 0
    %1716 = vmatpush1.bf16.msra.mxu0 0
    %1717 = vmatprep.subr.bf16.mxu0 0
    %1718 = vmatpush1.bf16.msra.mxu0 0
    %1719 = vmatprep.subr.bf16.mxu0 0
    %1720 = vmatpush1.bf16.msra.mxu0 0
    %1721 = vmatprep.subr.bf16.mxu0 0
    %1722 = vmatpush1.bf16.msra.mxu0 0
    %1723 = vmatprep.subr.bf16.mxu0 0
    %1724 = vmatpush1.bf16.msra.mxu0 0
    %1725 = vmatprep.subr.bf16.mxu0 0
    %1726 = vmatpush1.bf16.msra.mxu0 0
    %1727 = vmatprep.subr.bf16.mxu0 0
    %1728 = vmatpush1.bf16.msra.mxu0 0
    %1729 = vmatprep.subr.bf16.mxu0 0
    %1730 = vmatpush1.bf16.msra.mxu0 0
    %1731 = vmatprep.subr.bf16.mxu0 0
    %1732 = vmatpush1.bf16.msra.mxu0 0
    %1733 = vmatprep.mubr.bf16.mxu0 0
    %1734 = vmatmul.mubr.bf16.gmra.mrb[0].mxu0 %v1528
    %v1735 = vpop.f32.mrb[0].mxu0
    %v1736 = vadd.f32 %v1672, %v1735
    %v1737 = vpop.f32.mrb[0].mxu0
    %v1738 = vpop.f32.mrb[0].mxu0
    %v1739 = vpop.f32.mrb[0].mxu0
    %1740 = vdwg.mxu0
    %s1741 = scalar_lea.vmem %s13, 2
    %v1742 = vld [vmem:[%s1741] sm:$0x1]
    %v1744 = vlaneseq
    %v1745 = vshrl.u32 %v1744, 7
    %v1746 = vsub.s32 0, %v1745
    %v1747 = vrot.slane %v1742, %v1746
    %v1749 = vadd.f32 %v1736, %v1747
    %v1750 = vmul.f32 %v166, %v1578
    %v1751 = vadd.f32 %v1750, %v1329
    %v1753 = vrot.slane %v1749, 1
    %v1754 = vrot.slane %v1749, 2
    %v1755 = vrot.slane %v1749, 3
    %v1756 = vrot.slane %v1749, 4
    %v1757 = vrot.slane %v1749, 5
    %v1758 = vrot.slane %v1749, 6
    %v1759 = vrot.slane %v1749, 7
    %v1768 = vmul.f32 %v232, %v1749
    %v1769 = vmul.f32 %v233, %v1753
    %v1770 = vmul.f32 %v234, %v1754
    %v1771 = vmul.f32 %v235, %v1755
    %v1772 = vmul.f32 %v236, %v1756
    %v1773 = vmul.f32 %v237, %v1757
    %v1774 = vmul.f32 %v238, %v1758
    %v1775 = vmul.f32 %v239, %v1759
    %v1776 = vadd.f32 %v1768, %v1354
    %v1777 = vadd.f32 %v1769, %v1355
    %v1778 = vadd.f32 %v1770, %v1356
    %v1779 = vadd.f32 %v1771, %v1357
    %v1780 = vadd.f32 %v1772, %v1358
    %v1781 = vadd.f32 %v1773, %v1359
    %v1782 = vadd.f32 %v1774, %v1360
    %v1783 = vadd.f32 %v1775, %v1361
    %v1784 = vpack.c.bf16 %v569, %v569
    %v1785 = vld [vmem:[#allocation12] sm:$0xf]
    %v1786 = vld [vmem:[#allocation12 + $0x4] sm:$0xf]
    %v1787 = vld [vmem:[#allocation12 + $0x8] sm:$0xf]
    %v1788 = vld [vmem:[#allocation12 + $0xc] sm:$0xf]
    %v1789 = vld [vmem:[#allocation12 + $0x10] sm:$0xf]
    %v1790 = vld [vmem:[#allocation12 + $0x14] sm:$0xf]
    %v1791 = vld [vmem:[#allocation12 + $0x18] sm:$0xf]
    %v1792 = vld [vmem:[#allocation12 + $0x1c] sm:$0xf]
    %v1793 = vpack.c.bf16 %v1751, %v1751
    %v1794 = vld [vmem:[#allocation14] sm:$0xf]
    %v1795 = vld [vmem:[#allocation14 + $0x4] sm:$0xf]
    %v1796 = vld [vmem:[#allocation14 + $0x8] sm:$0xf]
    %v1797 = vld [vmem:[#allocation14 + $0xc] sm:$0xf]
    %v1798 = vld [vmem:[#allocation14 + $0x10] sm:$0xf]
    %v1799 = vld [vmem:[#allocation14 + $0x14] sm:$0xf]
    %v1800 = vld [vmem:[#allocation14 + $0x18] sm:$0xf]
    %v1801 = vld [vmem:[#allocation14 + $0x1c] sm:$0xf]
    %v1810 = vunpack.c.l.b16 %v1794
    %v1811 = vunpack.c.l.b16 %v1795
    %v1812 = vunpack.c.l.b16 %v1796
    %v1813 = vunpack.c.l.b16 %v1797
    %v1814 = vunpack.c.l.b16 %v1798
    %v1815 = vunpack.c.l.b16 %v1799
    %v1816 = vunpack.c.l.b16 %v1800
    %v1817 = vunpack.c.l.b16 %v1801
    %v1818 = vpack.c.b16 %v1811, %v1810
    %v1819 = vpack.c.b16 %v1813, %v1812
    %v1820 = vpack.c.b16 %v1815, %v1814
    %v1821 = vpack.c.b16 %v1817, %v1816
    %v1827 = vsel %vm404, %v1793, 0
    %1829 = vmatprep.subr.bf16.mxu0 0
    %1830 = vmatpush1.bf16.msra.mxu0 %v1818
    %1831 = vmatprep.subr.bf16.mxu0 0
    %1832 = vmatpush1.bf16.msra.mxu0 %v1819
    %1833 = vmatprep.subr.bf16.mxu0 0
    %1834 = vmatpush1.bf16.msra.mxu0 %v1820
    %1835 = vmatprep.subr.bf16.mxu0 0
    %1836 = vmatpush1.bf16.msra.mxu0 %v1821
    %1837 = vmatprep.subr.bf16.mxu0 0
    %1838 = vmatpush1.bf16.msra.mxu0 0
    %1839 = vmatprep.subr.bf16.mxu0 0
    %1840 = vmatpush1.bf16.msra.mxu0 0
    %1841 = vmatprep.subr.bf16.mxu0 0
    %1842 = vmatpush1.bf16.msra.mxu0 0
    %1843 = vmatprep.subr.bf16.mxu0 0
    %1844 = vmatpush1.bf16.msra.mxu0 0
    %1845 = vmatprep.subr.bf16.mxu0 0
    %1846 = vmatpush1.bf16.msra.mxu0 0
    %1847 = vmatprep.subr.bf16.mxu0 0
    %1848 = vmatpush1.bf16.msra.mxu0 0
    %1849 = vmatprep.subr.bf16.mxu0 0
    %1850 = vmatpush1.bf16.msra.mxu0 0
    %1851 = vmatprep.subr.bf16.mxu0 0
    %1852 = vmatpush1.bf16.msra.mxu0 0
    %1853 = vmatprep.subr.bf16.mxu0 0
    %1854 = vmatpush1.bf16.msra.mxu0 0
    %1855 = vmatprep.subr.bf16.mxu0 0
    %1856 = vmatpush1.bf16.msra.mxu0 0
    %1857 = vmatprep.subr.bf16.mxu0 0
    %1858 = vmatpush1.bf16.msra.mxu0 0
    %1859 = vmatprep.subr.bf16.mxu0 0
    %1860 = vmatpush1.bf16.msra.mxu0 0
    %1861 = vmatprep.mubr.bf16.mxu0 0
    %1862 = vmatmul.mubr.bf16.gmra.mrb[0].mxu0 %v1827
    %v1863 = vpop.f32.mrb[0].mxu0
    %v1864 = vadd.f32 0.0, %v1863
    %v1865 = vpop.f32.mrb[0].mxu0
    %v1866 = vpop.f32.mrb[0].mxu0
    %v1867 = vpop.f32.mrb[0].mxu0
    %1868 = vdwg.mxu0
    %v1877 = vunpack.c.l.b16 %v1785
    %v1878 = vunpack.c.l.b16 %v1786
    %v1879 = vunpack.c.l.b16 %v1787
    %v1880 = vunpack.c.l.b16 %v1788
    %v1881 = vunpack.c.l.b16 %v1789
    %v1882 = vunpack.c.l.b16 %v1790
    %v1883 = vunpack.c.l.b16 %v1791
    %v1884 = vunpack.c.l.b16 %v1792
    %v1885 = vpack.c.b16 %v1878, %v1877
    %v1886 = vpack.c.b16 %v1880, %v1879
    %v1887 = vpack.c.b16 %v1882, %v1881
    %v1888 = vpack.c.b16 %v1884, %v1883
    %v1894 = vsel %vm404, %v1784, 0
    %1896 = vmatprep.subr.bf16.mxu0 0
    %1897 = vmatpush1.bf16.msra.mxu0 %v1885
    %1898 = vmatprep.subr.bf16.mxu0 0
    %1899 = vmatpush1.bf16.msra.mxu0 %v1886
    %1900 = vmatprep.subr.bf16.mxu0 0
    %1901 = vmatpush1.bf16.msra.mxu0 %v1887
    %1902 = vmatprep.subr.bf16.mxu0 0
    %1903 = vmatpush1.bf16.msra.mxu0 %v1888
    %1904 = vmatprep.subr.bf16.mxu0 0
    %1905 = vmatpush1.bf16.msra.mxu0 0
    %1906 = vmatprep.subr.bf16.mxu0 0
    %1907 = vmatpush1.bf16.msra.mxu0 0
    %1908 = vmatprep.subr.bf16.mxu0 0
    %1909 = vmatpush1.bf16.msra.mxu0 0
    %1910 = vmatprep.subr.bf16.mxu0 0
    %1911 = vmatpush1.bf16.msra.mxu0 0
    %1912 = vmatprep.subr.bf16.mxu0 0
    %1913 = vmatpush1.bf16.msra.mxu0 0
    %1914 = vmatprep.subr.bf16.mxu0 0
    %1915 = vmatpush1.bf16.msra.mxu0 0
    %1916 = vmatprep.subr.bf16.mxu0 0
    %1917 = vmatpush1.bf16.msra.mxu0 0
    %1918 = vmatprep.subr.bf16.mxu0 0
    %1919 = vmatpush1.bf16.msra.mxu0 0
    %1920 = vmatprep.subr.bf16.mxu0 0
    %1921 = vmatpush1.bf16.msra.mxu0 0
    %1922 = vmatprep.subr.bf16.mxu0 0
    %1923 = vmatpush1.bf16.msra.mxu0 0
    %1924 = vmatprep.subr.bf16.mxu0 0
    %1925 = vmatpush1.bf16.msra.mxu0 0
    %1926 = vmatprep.subr.bf16.mxu0 0
    %1927 = vmatpush1.bf16.msra.mxu0 0
    %1928 = vmatprep.mubr.bf16.mxu0 0
    %1929 = vmatmul.mubr.bf16.gmra.mrb[0].mxu0 %v1894
    %v1930 = vpop.f32.mrb[0].mxu0
    %v1931 = vadd.f32 %v1864, %v1930
    %v1932 = vpop.f32.mrb[0].mxu0
    %v1933 = vpop.f32.mrb[0].mxu0
    %v1934 = vpop.f32.mrb[0].mxu0
    %1935 = vdwg.mxu0
    %v1936 = vpack.c.bf16 %v1776, %v1776
    %v1937 = vpack.c.bf16 %v1777, %v1777
    %v1938 = vpack.c.bf16 %v1778, %v1778
    %v1939 = vpack.c.bf16 %v1779, %v1779
    %v1940 = vpack.c.bf16 %v1780, %v1780
    %v1941 = vpack.c.bf16 %v1781, %v1781
    %v1942 = vpack.c.bf16 %v1782, %v1782
    %v1943 = vpack.c.bf16 %v1783, %v1783
    %v1944 = vld [vmem:[%s16] sm:$0xf]
    %v1945 = vld [vmem:[%s16 + $0x4] sm:$0xf]
    %v1946 = vld [vmem:[%s16 + $0x8] sm:$0xf]
    %v1947 = vld [vmem:[%s16 + $0xc] sm:$0xf]
    %v1948 = vld [vmem:[%s16 + $0x10] sm:$0xf]
    %v1949 = vld [vmem:[%s16 + $0x14] sm:$0xf]
    %v1950 = vld [vmem:[%s16 + $0x18] sm:$0xf]
    %v1951 = vld [vmem:[%s16 + $0x1c] sm:$0xf]
    %v1952 = vld [vmem:[%s16 + $0x20] sm:$0xf]
    %v1953 = vld [vmem:[%s16 + $0x24] sm:$0xf]
    %v1954 = vld [vmem:[%s16 + $0x28] sm:$0xf]
    %v1955 = vld [vmem:[%s16 + $0x2c] sm:$0xf]
    %v1964 = vunpack.c.l.b16 %v1936
    %v1965 = vunpack.c.l.b16 %v1937
    %v1966 = vunpack.c.l.b16 %v1938
    %v1967 = vunpack.c.l.b16 %v1939
    %v1968 = vunpack.c.l.b16 %v1940
    %v1969 = vunpack.c.l.b16 %v1941
    %v1970 = vunpack.c.l.b16 %v1942
    %v1971 = vunpack.c.l.b16 %v1943
    %v1972 = vrot.slane %v1965, 7
    %v1973 = vsel %vm286, %v1972, %v1964
    %v1974 = vrot.slane %v1966, 6
    %v1975 = vsel %vm288, %v1974, %v1973
    %v1976 = vrot.slane %v1967, 5
    %v1977 = vsel %vm290, %v1976, %v1975
    %v1978 = vrot.slane %v1968, 4
    %v1979 = vsel %vm292, %v1978, %v1977
    %v1980 = vrot.slane %v1969, 3
    %v1981 = vsel %vm294, %v1980, %v1979
    %v1982 = vrot.slane %v1970, 2
    %v1983 = vsel %vm296, %v1982, %v1981
    %v1984 = vrot.slane %v1971, 1
    %v1985 = vsel %vm298, %v1984, %v1983
    %v1986 = vpack.c.b16 %v1985, %v1985
    %v1999 = vunpack.c.l.b16 %v1944
    %v2000 = vunpack.c.l.b16 %v1945
    %v2001 = vunpack.c.l.b16 %v1946
    %v2002 = vunpack.c.l.b16 %v1947
    %v2003 = vunpack.c.l.b16 %v1948
    %v2004 = vunpack.c.l.b16 %v1949
    %v2005 = vunpack.c.l.b16 %v1950
    %v2006 = vunpack.c.l.b16 %v1951
    %v2007 = vunpack.c.l.b16 %v1952
    %v2008 = vunpack.c.l.b16 %v1953
    %v2009 = vunpack.c.l.b16 %v1954
    %v2010 = vunpack.c.l.b16 %v1955
    %v2011 = vpack.c.b16 %v2000, %v1999
    %v2012 = vpack.c.b16 %v2002, %v2001
    %v2013 = vpack.c.b16 %v2004, %v2003
    %v2014 = vpack.c.b16 %v2006, %v2005
    %v2015 = vpack.c.b16 %v2008, %v2007
    %v2016 = vpack.c.b16 %v2010, %v2009
    %v2024 = vsel %vm175, %v1986, 0
    %2026 = vmatprep.subr.bf16.mxu0 0
    %2027 = vmatpush1.bf16.msra.mxu0 %v2011
    %2028 = vmatprep.subr.bf16.mxu0 0
    %2029 = vmatpush1.bf16.msra.mxu0 %v2012
    %2030 = vmatprep.subr.bf16.mxu0 0
    %2031 = vmatpush1.bf16.msra.mxu0 %v2013
    %2032 = vmatprep.subr.bf16.mxu0 0
    %2033 = vmatpush1.bf16.msra.mxu0 %v2014
    %2034 = vmatprep.subr.bf16.mxu0 0
    %2035 = vmatpush1.bf16.msra.mxu0 %v2015
    %2036 = vmatprep.subr.bf16.mxu0 0
    %2037 = vmatpush1.bf16.msra.mxu0 %v2016
    %2038 = vmatprep.subr.bf16.mxu0 0
    %2039 = vmatpush1.bf16.msra.mxu0 0
    %2040 = vmatprep.subr.bf16.mxu0 0
    %2041 = vmatpush1.bf16.msra.mxu0 0
    %2042 = vmatprep.subr.bf16.mxu0 0
    %2043 = vmatpush1.bf16.msra.mxu0 0
    %2044 = vmatprep.subr.bf16.mxu0 0
    %2045 = vmatpush1.bf16.msra.mxu0 0
    %2046 = vmatprep.subr.bf16.mxu0 0
    %2047 = vmatpush1.bf16.msra.mxu0 0
    %2048 = vmatprep.subr.bf16.mxu0 0
    %2049 = vmatpush1.bf16.msra.mxu0 0
    %2050 = vmatprep.subr.bf16.mxu0 0
    %2051 = vmatpush1.bf16.msra.mxu0 0
    %2052 = vmatprep.subr.bf16.mxu0 0
    %2053 = vmatpush1.bf16.msra.mxu0 0
    %2054 = vmatprep.subr.bf16.mxu0 0
    %2055 = vmatpush1.bf16.msra.mxu0 0
    %2056 = vmatprep.subr.bf16.mxu0 0
    %2057 = vmatpush1.bf16.msra.mxu0 0
    %2058 = vmatprep.mubr.bf16.mxu0 0
    %2059 = vmatmul.mubr.bf16.gmra.mrb[0].mxu0 %v2024
    %v2060 = vpop.f32.mrb[0].mxu0
    %v2061 = vadd.f32 0.0, %v2060
    %v2062 = vpop.f32.mrb[0].mxu0
    %v2063 = vpop.f32.mrb[0].mxu0
    %v2064 = vpop.f32.mrb[0].mxu0
    %2065 = vdwg.mxu0
    %v2066 = vadd.f32 %v1931, %v2061
    %v2067 = vld [vmem:[%s17] sm:$0x1]
    %v2069 = vlaneseq
    %v2070 = vshrl.u32 %v2069, 7
    %v2071 = vsub.s32 0, %v2070
    %v2072 = vrot.slane %v2067, %v2071
    %v2074 = vadd.f32 %v2066, %v2072
    %v2075 = vmax.f32 %v2074, 0.0
    %v2076 = vpack.c.bf16 %v2075, %v2075
    %v2077 = vld [vmem:[%s18] sm:$0xf]
    %v2078 = vld [vmem:[%s18 + $0x4] sm:$0xf]
    %v2079 = vld [vmem:[%s18 + $0x8] sm:$0xf]
    %v2080 = vld [vmem:[%s18 + $0xc] sm:$0xf]
    %v2081 = vld [vmem:[%s18 + $0x10] sm:$0xf]
    %v2082 = vld [vmem:[%s18 + $0x14] sm:$0xf]
    %v2083 = vld [vmem:[%s18 + $0x18] sm:$0xf]
    %v2084 = vld [vmem:[%s18 + $0x1c] sm:$0xf]
    %v2085 = vld [vmem:[%s18 + $0x20] sm:$0xf]
    %v2086 = vld [vmem:[%s18 + $0x24] sm:$0xf]
    %v2087 = vld [vmem:[%s18 + $0x28] sm:$0xf]
    %v2088 = vld [vmem:[%s18 + $0x2c] sm:$0xf]
    %v2089 = vld [vmem:[%s18 + $0x30] sm:$0xf]
    %v2090 = vld [vmem:[%s18 + $0x34] sm:$0xf]
    %v2091 = vld [vmem:[%s18 + $0x38] sm:$0xf]
    %v2092 = vld [vmem:[%s18 + $0x3c] sm:$0xf]
    %v2093 = vld [vmem:[%s19] sm:$0x1]
    %v2095 = vlaneseq
    %v2096 = vshrl.u32 %v2095, 7
    %v2097 = vsub.s32 0, %v2096
    %v2098 = vrot.slane %v2093, %v2097
    %v2116 = vunpack.c.l.b16 %v2077
    %v2117 = vunpack.c.l.b16 %v2078
    %v2118 = vunpack.c.l.b16 %v2079
    %v2119 = vunpack.c.l.b16 %v2080
    %v2120 = vunpack.c.l.b16 %v2081
    %v2121 = vunpack.c.l.b16 %v2082
    %v2122 = vunpack.c.l.b16 %v2083
    %v2123 = vunpack.c.l.b16 %v2084
    %v2124 = vunpack.c.l.b16 %v2085
    %v2125 = vunpack.c.l.b16 %v2086
    %v2126 = vunpack.c.l.b16 %v2087
    %v2127 = vunpack.c.l.b16 %v2088
    %v2128 = vunpack.c.l.b16 %v2089
    %v2129 = vunpack.c.l.b16 %v2090
    %v2130 = vunpack.c.l.b16 %v2091
    %v2131 = vunpack.c.l.b16 %v2092
    %v2132 = vpack.c.b16 %v2117, %v2116
    %v2133 = vpack.c.b16 %v2119, %v2118
    %v2134 = vpack.c.b16 %v2121, %v2120
    %v2135 = vpack.c.b16 %v2123, %v2122
    %v2136 = vpack.c.b16 %v2125, %v2124
    %v2137 = vpack.c.b16 %v2127, %v2126
    %v2138 = vpack.c.b16 %v2129, %v2128
    %v2139 = vpack.c.b16 %v2131, %v2130
    %2148 = vmatprep.subr.bf16.mxu0 0
    %2149 = vmatpush1.bf16.msra.mxu0 %v2132
    %2150 = vmatprep.subr.bf16.mxu0 0
    %2151 = vmatpush1.bf16.msra.mxu0 %v2133
    %2152 = vmatprep.subr.bf16.mxu0 0
    %2153 = vmatpush1.bf16.msra.mxu0 %v2134
    %2154 = vmatprep.subr.bf16.mxu0 0
    %2155 = vmatpush1.bf16.msra.mxu0 %v2135
    %2156 = vmatprep.subr.bf16.mxu0 0
    %2157 = vmatpush1.bf16.msra.mxu0 %v2136
    %2158 = vmatprep.subr.bf16.mxu0 0
    %2159 = vmatpush1.bf16.msra.mxu0 %v2137
    %2160 = vmatprep.subr.bf16.mxu0 0
    %2161 = vmatpush1.bf16.msra.mxu0 %v2138
    %2162 = vmatprep.subr.bf16.mxu0 0
    %2163 = vmatpush1.bf16.msra.mxu0 %v2139
    %2164 = vmatprep.subr.bf16.mxu0 0
    %2165 = vmatpush1.bf16.msra.mxu0 0
    %2166 = vmatprep.subr.bf16.mxu0 0
    %2167 = vmatpush1.bf16.msra.mxu0 0
    %2168 = vmatprep.subr.bf16.mxu0 0
    %2169 = vmatpush1.bf16.msra.mxu0 0
    %2170 = vmatprep.subr.bf16.mxu0 0
    %2171 = vmatpush1.bf16.msra.mxu0 0
    %2172 = vmatprep.subr.bf16.mxu0 0
    %2173 = vmatpush1.bf16.msra.mxu0 0
    %2174 = vmatprep.subr.bf16.mxu0 0
    %2175 = vmatpush1.bf16.msra.mxu0 0
    %2176 = vmatprep.subr.bf16.mxu0 0
    %2177 = vmatpush1.bf16.msra.mxu0 0
    %2178 = vmatprep.subr.bf16.mxu0 0
    %2179 = vmatpush1.bf16.msra.mxu0 0
    %2180 = vmatprep.mubr.bf16.mxu0 0
    %2181 = vmatmul.mubr.bf16.gmra.mrb[0].mxu0 %v2076
    %v2182 = vpop.f32.mrb[0].mxu0
    %v2183 = vadd.f32 %v2098, %v2182
    %v2184 = vpop.f32.mrb[0].mxu0
    %v2185 = vpop.f32.mrb[0].mxu0
    %v2186 = vpop.f32.mrb[0].mxu0
    %2187 = vdwg.mxu0
    %v2188 = vmax.f32 %v2183, 0.0
    %v2189 = vpack.c.bf16 %v2188, %v2188
    %v2190 = vld [vmem:[%s20] sm:$0xf]
    %v2191 = vld [vmem:[%s20 + $0x4] sm:$0xf]
    %v2192 = vld [vmem:[%s20 + $0x8] sm:$0xf]
    %v2193 = vld [vmem:[%s20 + $0xc] sm:$0xf]
    %v2194 = vld [vmem:[%s20 + $0x10] sm:$0xf]
    %v2195 = vld [vmem:[%s20 + $0x14] sm:$0xf]
    %v2196 = vld [vmem:[%s20 + $0x18] sm:$0xf]
    %v2197 = vld [vmem:[%s20 + $0x1c] sm:$0xf]
    %v2198 = vld [vmem:[#allocation2] sm:$0x1]
    %v2200 = vlaneseq
    %v2201 = vshrl.u32 %v2200, 7
    %v2202 = vsub.s32 0, %v2201
    %v2203 = vrot.slane %v2198, %v2202
    %v2213 = vunpack.c.l.b16 %v2190
    %v2214 = vunpack.c.l.b16 %v2191
    %v2215 = vunpack.c.l.b16 %v2192
    %v2216 = vunpack.c.l.b16 %v2193
    %v2217 = vunpack.c.l.b16 %v2194
    %v2218 = vunpack.c.l.b16 %v2195
    %v2219 = vunpack.c.l.b16 %v2196
    %v2220 = vunpack.c.l.b16 %v2197
    %v2221 = vpack.c.b16 %v2214, %v2213
    %v2222 = vpack.c.b16 %v2216, %v2215
    %v2223 = vpack.c.b16 %v2218, %v2217
    %v2224 = vpack.c.b16 %v2220, %v2219
    %v2230 = vsel %vm404, %v2189, 0
    %2232 = vmatprep.subr.bf16.mxu0 0
    %2233 = vmatpush1.bf16.msra.mxu0 %v2221
    %2234 = vmatprep.subr.bf16.mxu0 0
    %2235 = vmatpush1.bf16.msra.mxu0 %v2222
    %2236 = vmatprep.subr.bf16.mxu0 0
    %2237 = vmatpush1.bf16.msra.mxu0 %v2223
    %2238 = vmatprep.subr.bf16.mxu0 0
    %2239 = vmatpush1.bf16.msra.mxu0 %v2224
    %2240 = vmatprep.subr.bf16.mxu0 0
    %2241 = vmatpush1.bf16.msra.mxu0 0
    %2242 = vmatprep.subr.bf16.mxu0 0
    %2243 = vmatpush1.bf16.msra.mxu0 0
    %2244 = vmatprep.subr.bf16.mxu0 0
    %2245 = vmatpush1.bf16.msra.mxu0 0
    %2246 = vmatprep.subr.bf16.mxu0 0
    %2247 = vmatpush1.bf16.msra.mxu0 0
    %2248 = vmatprep.subr.bf16.mxu0 0
    %2249 = vmatpush1.bf16.msra.mxu0 0
    %2250 = vmatprep.subr.bf16.mxu0 0
    %2251 = vmatpush1.bf16.msra.mxu0 0
    %2252 = vmatprep.subr.bf16.mxu0 0
    %2253 = vmatpush1.bf16.msra.mxu0 0
    %2254 = vmatprep.subr.bf16.mxu0 0
    %2255 = vmatpush1.bf16.msra.mxu0 0
    %2256 = vmatprep.subr.bf16.mxu0 0
    %2257 = vmatpush1.bf16.msra.mxu0 0
    %2258 = vmatprep.subr.bf16.mxu0 0
    %2259 = vmatpush1.bf16.msra.mxu0 0
    %2260 = vmatprep.subr.bf16.mxu0 0
    %2261 = vmatpush1.bf16.msra.mxu0 0
    %2262 = vmatprep.subr.bf16.mxu0 0
    %2263 = vmatpush1.bf16.msra.mxu0 0
    %2264 = vmatprep.mubr.bf16.mxu0 0
    %2265 = vmatmul.mubr.bf16.gmra.mrb[0].mxu0 %v2230
    %v2266 = vpop.f32.mrb[0].mxu0
    %v2267 = vadd.f32 %v2203, %v2266
    %v2268 = vpop.f32.mrb[0].mxu0
    %v2269 = vpop.f32.mrb[0].mxu0
    %v2270 = vpop.f32.mrb[0].mxu0
    %2271 = vdwg.mxu0
    %vm2272 = vcmask 7168
    %2273 = vst.msk [vmem:[%s22] sm:$0xff] %vm2272, %v2267
    %v2274 = vsub.f32 0.0, %v2267
    %v2275 = vmul.f32 %v2274, 1.442695
    %v2276 = vpow.pop %v2275
    %v2277 = vadd.f32 %v2276, 1.0
    %v2278 = vrcp.pop %v2277
    %v2279 = vmul.f32 1.0, %v2278
    %v2280 = vmax.f32 %v2279, 1e-07
    %v2281 = vmin.f32 %v2280, 0.9999999
    %v2282 = vlog2.pop %v2281
    %v2283 = vmul.f32 %v2282, 0.6931472
    %v2284 = vmul.f32 %v240, %v2283
    %v2285 = vsub.f32 1.0, %v240
    %v2286 = vsub.f32 1.0, %v2281
    %v2287 = vlog2.pop %v2286
    %v2288 = vmul.f32 %v2287, 0.6931472
    %v2289 = vmul.f32 %v2285, %v2288
    %v2290 = vadd.f32 %v2284, %v2289
    %v2291 = vsub.f32 0.0, %v2290
    %v2292 = vsel %vm2272, %v2291, 0.0
    %2293 = vadd.xlane.f32.xlu0 %v2292
    %v2294 = vpop.xlane.xlu0 %2293
    %v2295 = vrot.slane %v2294, 4
    %v2296 = vadd.f32 %v2294, %v2295
    %v2297 = vrot.slane %v2296, 2
    %v2298 = vadd.f32 %v2296, %v2297
    %v2299 = vrot.slane %v2298, 1
    %v2300 = vadd.f32 %v2298, %v2299
    %s2301 = vtos %v2300
    %v2302 = vstv %s2301
    %v2303 = vrcp.pop 8.0
    %v2304 = vmul.f32 %v2302, %v2303
    %vm2305 = vcmask 0
    %2306 = vst.msk [vmem:[#allocation15] sm:$0x1] %vm2305, %v2304
    // Predicated region
    $region118: #{tpu_custom_call.1} parent=1 // pred_check
      _
    $region119: #{tpu_custom_call.1} parent=1 // pred_check_branch
      %2308 = sbr.rel (0) target = $region121
    $region120: #{tpu_custom_call.1} parent=1 // pred_region
      _
    $region121: #{tpu_custom_call.1} parent=1 // pred_fallthru
      _
    // Predicated region
    $region122: #{tpu_custom_call.1} parent=1 // pred_check
      _
    $region123: #{tpu_custom_call.1} parent=1 // pred_check_branch
      %2310 = sbr.rel (0) target = $region125
    $region124: #{tpu_custom_call.1} parent=1 // pred_region
      %s2312 = ssub.s32 16, 16
      %2313 = vsyncadd [#allocation5], %s2312
      %s2315 = sshll.u32 [#allocation15], 4
      %s2316 = int_to_ptr.vmem [resolvable:$true] %s2315
      %2318 = dma.vmem_to_hbm [thread:$0]  %s2316, 16, %s23, [#allocation5]
    $region125: #{tpu_custom_call.1} parent=1 // pred_fallthru
      _
    // Predicated region
    $region126: #{tpu_custom_call.1} parent=1 // pred_check
      _
    $region127: #{tpu_custom_call.1} parent=1 // pred_check_branch
      %2320 = sbr.rel (0) target = $region129
    $region128: #{tpu_custom_call.1} parent=1 // pred_region
      _
    $region129: #{tpu_custom_call.1} parent=1 // pred_fallthru
      _
    // Predicated region
    $region130: #{tpu_custom_call.1} parent=1 // pred_check
      _
    $region131: #{tpu_custom_call.1} parent=1 // pred_check_branch
      %2322 = sbr.rel (0) target = $region133
    $region132: #{tpu_custom_call.1} parent=1 // pred_region
      %2323 = dma.done [#allocation5], 16
    $region133: #{tpu_custom_call.1} parent=1 // pred_fallthru
      _
    %2324 = vsyncpa [#allocation4], 1
    %2325 = vsyncpa [#allocation7], 1
    %2326 = vsyncpa [#allocation10], 1
    %2327 = vsyncpa [#allocation13], 1
    %2328 = vsyncpa [#allocation5], 1

</llo_original>
